<compile_context>
chip_gen: v7x
topology: tpu7x:2x2x1
jax: 0.10.0
libtpu: 0.0.40
codegen_flags: <defaults>
</compile_context>

<pallas_src>
from functools import partial

import jax
import jax.numpy as jnp
from jax.experimental import pallas as pl
from jax.experimental.pallas import tpu as pltpu


F0 = 16          # total downsampling of the four stride-2 layers
KSIZE = 4
NEG_SLOPE = 0.2


# ------------------------------ Pallas kernel --------------------------------
def _disc_fused_kernel(*refs, U, out_len, compute_dtype, neg_slope):
    # refs layout:
    #   [0]        x_ref      (1, U+2, 16*C_in)  space-to-depth'd, zero-padded input
    #   [1..16]    4 x (Bm, B0, Bp, bias)        block-banded weights per stride-2 layer
    #   [17],[18]  w5 (C4, 4), b5 (1, 1)         final stride-1 conv
    #   [19]       o_ref      (1, out_len, 1)
    #   [20..23]   act scratch (U+2, F_{l+1}*C_{l+1}) f32, one per stride-2 layer
    assert len(refs) == 24
    x_ref = refs[0]
    w_refs = refs[1:17]
    w5_ref, b5_ref = refs[17], refs[18]
    o_ref = refs[19]
    act_bufs = refs[20:24]

    # Zero the activation slabs: rows 0 and U+1 stay zero -> the conv's padding=1.
    for buf in act_bufs:
        buf[...] = jnp.zeros_like(buf)

    cur = x_ref[0, :, :]                               # (U+2, F_l*C_l) f32
    # ---- four stride-2 conv + LeakyReLU layers -------------------------------
    for l in range(4):
        bm = w_refs[4 * l + 0][...]                    # (Win, Wout) compute_dtype
        b0 = w_refs[4 * l + 1][...]
        bp = w_refs[4 * l + 2][...]
        bias = w_refs[4 * l + 3][...]                  # (1, Wout) f32

        lo = cur[0:U, :].astype(compute_dtype)         # rows u      (left halo)
        mid = cur[1:U + 1, :].astype(compute_dtype)    # rows u + 1  (body)
        hi = cur[2:U + 2, :].astype(compute_dtype)     # rows u + 2  (right halo)

        acc = jnp.dot(lo, bm, preferred_element_type=jnp.float32)
        acc = acc + jnp.dot(mid, b0, preferred_element_type=jnp.float32)
        acc = acc + jnp.dot(hi, bp, preferred_element_type=jnp.float32)
        acc = acc + bias
        acc = jnp.where(acc >= 0, acc, neg_slope * acc)

        act_bufs[l][1:U + 1, :] = acc                  # rows 1..U; 0 & U+1 stay zero
        cur = act_bufs[l][...]                         # padded slab for next layer

    # ---- final stride-1 conv (C4 -> 1), no activation ------------------------
    w5 = w5_ref[...]                                   # (C4, 4) compute_dtype
    y = jnp.zeros((out_len, 1), jnp.float32)
    for k in range(KSIZE):
        slab = cur[k:k + out_len, :].astype(compute_dtype)
        y = y + jnp.dot(slab, w5[:, k:k + 1], preferred_element_type=jnp.float32)
    y = y + b5_ref[...]                                # (1, 1) broadcast
    o_ref[0, :, :] = y.astype(o_ref.dtype)


# ------------------------- init-time weight preprocessing ---------------------
def _spectral_normalize(w, key, n_power_iterations=1, eps=1e-12):
    # Mirrors torch.nn.utils.spectral_norm (power iteration on (C_out, C_in*K)).
    c_out = w.shape[0]
    w_mat = w.reshape(c_out, -1)
    u = jax.random.normal(key, (c_out,), dtype=w.dtype)
    u = u / (jnp.linalg.norm(u) + eps)
    v = None
    for _ in range(n_power_iterations):
        v = w_mat.T @ u
        v = v / (jnp.linalg.norm(v) + eps)
        u = w_mat @ v
        u = u / (jnp.linalg.norm(u) + eps)
    sigma = u @ (w_mat @ v)
    return w / sigma


def init_discriminator_params(key, in_channels=1, base_channels=32):
    params = []
    ch = in_channels
    for mult in [1, 2, 4, 8]:
        out_ch = base_channels * mult
        key, kw, kb, ku = jax.random.split(key, 4)
        w = 0.1 * jax.random.normal(kw, (out_ch, ch, KSIZE), dtype=jnp.float32)
        b = 0.01 * jax.random.normal(kb, (out_ch,), dtype=jnp.float32)
        w = _spectral_normalize(w, ku)
        params.append((w, b, 2, 1, True))   # (weight, bias, stride, padding, leaky)
        ch = out_ch
    key, kw, kb, ku = jax.random.split(key, 4)
    w = 0.1 * jax.random.normal(kw, (1, ch, KSIZE), dtype=jnp.float32)
    b = 0.01 * jax.random.normal(kb, (1,), dtype=jnp.float32)
    w = _spectral_normalize(w, ku)
    params.append((w, b, 1, 1, False))
    return params


def _block_band_matrices(w, f_in):
    """Conv1d(k=4,s=2,p=1) weight (C_out,C_in,4) -> (Bm,B0,Bp), each
    (f_in*C_in, f_out*C_out) with f_out = f_in//2, implementing
    out_row[u+1] = in_row[u] @ Bm + in_row[u+1] @ B0 + in_row[u+2] @ Bp."""
    c_out, c_in, k = w.shape
    assert k == KSIZE and f_in % 2 == 0
    f_out = f_in // 2
    wt = jnp.transpose(w, (1, 0, 2))                   # (C_in, C_out, K)
    b0 = jnp.zeros((f_in * c_in, f_out * c_out), jnp.float32)
    for j in range(f_out):
        for kk in range(KSIZE):
            r = 2 * j + kk - 1                         # input sub-position
            if 0 <= r < f_in:
                b0 = b0.at[r * c_in:(r + 1) * c_in,
                           j * c_out:(j + 1) * c_out].set(wt[:, :, kk])
    bm = jnp.zeros_like(b0).at[(f_in - 1) * c_in:f_in * c_in, 0:c_out].set(wt[:, :, 0])
    bp = jnp.zeros_like(b0).at[0:c_in, (f_out - 1) * c_out:f_out * c_out].set(wt[:, :, 3])
    return bm, b0, bp


def build_fused_params(params, compute_dtype=jnp.bfloat16):
    """Precompute (once, plain JAX) the kernel-side weight arrays."""
    assert len(params) == 5
    fused = []
    f = F0
    for l in range(4):
        w, b, stride, padding, act = params[l]
        assert stride == 2 and padding == 1 and act and w.shape[2] == KSIZE
        bm, b0, bp = _block_band_matrices(w, f)
        f //= 2
        bias_blk = jnp.tile(b, f)[None, :].astype(jnp.float32)       # (1, f*C_out)
        fused += [bm.astype(compute_dtype), b0.astype(compute_dtype),
                  bp.astype(compute_dtype), bias_blk]
    w5, b5, stride, padding, act = params[4]
    assert stride == 1 and padding == 1 and (not act) and w5.shape[0] == 1
    fused += [w5[0].astype(compute_dtype),                            # (C4, 4)
              jnp.reshape(b5, (1, 1)).astype(jnp.float32)]
    return fused


# --------------------------------- forward -----------------------------------
def _space_to_depth_pad(x, f):
    """(N, C, L) -> (N, L//f + 2, f*C); row u holds positions f*(u-1)..f*u-1,
    first/last rows are the zero padding for padding=1."""
    n, c, l = x.shape
    assert l % f == 0
    xt = jnp.transpose(x, (0, 2, 1)).reshape(n, l // f, f * c)
    z = jnp.zeros((n, 1, f * c), x.dtype)
    return jnp.concatenate([z, xt, z], axis=1)


def discriminator_forward(fused, x):
    """x: (N, C_in, L), L % 16 == 0, L >= 32.  Returns (N, 1, L//16 - 1)."""
    n, c_in, l = x.shape
    assert l % F0 == 0 and l // F0 >= 2, "input length must be a multiple of 16 (>= 32)"
    u = l // F0
    out_len = u - 1
    compute_dtype = fused[0].dtype

    xs = _space_to_depth_pad(x, F0)                    # (N, U+2, 16*C_in)

    in_arrays = [xs] + list(fused)
    in_specs = [pl.BlockSpec((1, u + 2, F0 * c_in), lambda nn: (nn, 0, 0))]
    for arr in fused:                                  # all weights are 2-D, full-block
        in_specs.append(pl.BlockSpec(arr.shape, lambda nn: (0, 0)))

    act_widths = [fused[4 * i + 3].shape[1] for i in range(4)]
    scratch_shapes = [pltpu.VMEM((u + 2, w_), jnp.float32) for w_ in act_widths]

    c4 = fused[16].shape[0]
    widths_in = [F0 * c_in] + act_widths[:-1]
    flops = sum(3 * 2 * u * win * wout for win, wout in zip(widths_in, act_widths))
    flops = n * (flops + 2 * out_len * c4 * KSIZE)
    bytes_accessed = sum(int(a.size) * a.dtype.itemsize for a in in_arrays)
    bytes_accessed += n * out_len * x.dtype.itemsize
    cost = pl.CostEstimate(flops=int(flops), transcendentals=0,
                           bytes_accessed=int(bytes_accessed))

    kernel = partial(_disc_fused_kernel, U=u, out_len=out_len,
                     compute_dtype=compute_dtype, neg_slope=NEG_SLOPE)

    y = pl.pallas_call(
        kernel,
        out_shape=jax.ShapeDtypeStruct((n, out_len, 1), x.dtype),
        grid=(n,),
        in_specs=in_specs,
        out_specs=pl.BlockSpec((1, out_len, 1), lambda nn: (nn, 0, 0)),
        scratch_shapes=scratch_shapes,
        compiler_params=pltpu.CompilerParams(
            dimension_semantics=("parallel",),
            vmem_limit_bytes=32 * 1024 * 1024,
        ),
        cost_estimate=cost,
    )(*in_arrays)

    # (N, out_len, 1) -> (N, 1, out_len): tiny, done once by XLA outside the kernel.
    return jnp.transpose(y, (0, 2, 1))


# Pure-JAX reference (no Pallas) for the correctness check.
def discriminator_reference(params, x):
    for (w, b, stride, padding, act) in params:
        y = jax.lax.conv_general_dilated(
            x, w, window_strides=(stride,), padding=[(padding, padding)],
            dimension_numbers=("NCH", "OIH", "NCH"),
        ) + b[None, :, None]
        x = jnp.where(y >= 0, y, NEG_SLOPE * y) if act else y
    return x


if __name__ == "__main__":
    key = jax.random.PRNGKey(0)
    key, kp, kx = jax.random.split(key, 3)

    in_channels = 1
    base_channels = 8          # small demo, same module structure
    n, l = 2, 64               # 64 -> 32 -> 16 -> 8 -> 4 -> 3

    params = init_discriminator_params(kp, in_channels, base_channels)
    x = jax.random.normal(kx, (n, in_channels, l), dtype=jnp.float32)

    ref = jax.block_until_ready(discriminator_reference(params, x))
    assert ref.shape == (n, 1, l // 16 - 1)

    fwd = jax.jit(discriminator_forward)

    # bf16 MXU path (the performance configuration).
    fused_bf16 = build_fused_params(params, compute_dtype=jnp.bfloat16)
    out = jax.block_until_ready(fwd(fused_bf16, x))
    assert out.shape == ref.shape
    rel = float(jnp.linalg.norm(out - ref) / (jnp.linalg.norm(ref) + 1e-12))
    assert rel < 5e-2, f"bf16 path relative L2 error too large: {rel}"

    # f32 path for a tight numerical check of the kernel math itself.
    fused_f32 = build_fused_params(params, compute_dtype=jnp.float32)
    out32 = jax.block_until_ready(fwd(fused_f32, x))
    assert jnp.allclose(out32, ref, rtol=1e-3, atol=1e-3)

    print("KERNEL_OK")
</pallas_src>

<mosaic_0001>
module attributes {stable_mosaic.version = 11 : i64} {
  func.func @_disc_fused_kernel(%arg0: i32, %arg1: memref<1x6x16xf32, #tpu.memory_space<vmem>>, %arg2: memref<16x64xbf16, #tpu.memory_space<vmem>>, %arg3: memref<16x64xbf16, #tpu.memory_space<vmem>>, %arg4: memref<16x64xbf16, #tpu.memory_space<vmem>>, %arg5: memref<1x64xf32, #tpu.memory_space<vmem>>, %arg6: memref<64x64xbf16, #tpu.memory_space<vmem>>, %arg7: memref<64x64xbf16, #tpu.memory_space<vmem>>, %arg8: memref<64x64xbf16, #tpu.memory_space<vmem>>, %arg9: memref<1x64xf32, #tpu.memory_space<vmem>>, %arg10: memref<64x64xbf16, #tpu.memory_space<vmem>>, %arg11: memref<64x64xbf16, #tpu.memory_space<vmem>>, %arg12: memref<64x64xbf16, #tpu.memory_space<vmem>>, %arg13: memref<1x64xf32, #tpu.memory_space<vmem>>, %arg14: memref<64x64xbf16, #tpu.memory_space<vmem>>, %arg15: memref<64x64xbf16, #tpu.memory_space<vmem>>, %arg16: memref<64x64xbf16, #tpu.memory_space<vmem>>, %arg17: memref<1x64xf32, #tpu.memory_space<vmem>>, %arg18: memref<64x4xbf16, #tpu.memory_space<vmem>>, %arg19: memref<1x1xf32, #tpu.memory_space<vmem>>, %arg20: memref<1x3x1xf32, #tpu.memory_space<vmem>>, %arg21: memref<6x64xf32, #tpu.memory_space<vmem>>, %arg22: memref<6x64xf32, #tpu.memory_space<vmem>>, %arg23: memref<6x64xf32, #tpu.memory_space<vmem>>, %arg24: memref<6x64xf32, #tpu.memory_space<vmem>>) attributes {dimension_semantics = [#tpu.dimension_semantics<parallel>], iteration_bounds = array<i64: 2>, scalar_prefetch = 0 : i64, scratch_operands = 4 : i64, tpu.core_type = #tpu.core_type<tc>, window_params = [{transform_indices = @transform_0, window_bounds = array<i64: 1, 6, 16>}, {pipeline_mode = #tpu.pipeline_mode<synchronous>, transform_indices = @transform_1, window_bounds = array<i64: 16, 64>}, {pipeline_mode = #tpu.pipeline_mode<synchronous>, transform_indices = @transform_2, window_bounds = array<i64: 16, 64>}, {pipeline_mode = #tpu.pipeline_mode<synchronous>, transform_indices = @transform_3, window_bounds = array<i64: 16, 64>}, {pipeline_mode = #tpu.pipeline_mode<synchronous>, transform_indices = @transform_4, window_bounds = array<i64: 1, 64>}, {pipeline_mode = #tpu.pipeline_mode<synchronous>, transform_indices = @transform_5, window_bounds = array<i64: 64, 64>}, {pipeline_mode = #tpu.pipeline_mode<synchronous>, transform_indices = @transform_6, window_bounds = array<i64: 64, 64>}, {pipeline_mode = #tpu.pipeline_mode<synchronous>, transform_indices = @transform_7, window_bounds = array<i64: 64, 64>}, {pipeline_mode = #tpu.pipeline_mode<synchronous>, transform_indices = @transform_8, window_bounds = array<i64: 1, 64>}, {pipeline_mode = #tpu.pipeline_mode<synchronous>, transform_indices = @transform_9, window_bounds = array<i64: 64, 64>}, {pipeline_mode = #tpu.pipeline_mode<synchronous>, transform_indices = @transform_10, window_bounds = array<i64: 64, 64>}, {pipeline_mode = #tpu.pipeline_mode<synchronous>, transform_indices = @transform_11, window_bounds = array<i64: 64, 64>}, {pipeline_mode = #tpu.pipeline_mode<synchronous>, transform_indices = @transform_12, window_bounds = array<i64: 1, 64>}, {pipeline_mode = #tpu.pipeline_mode<synchronous>, transform_indices = @transform_13, window_bounds = array<i64: 64, 64>}, {pipeline_mode = #tpu.pipeline_mode<synchronous>, transform_indices = @transform_14, window_bounds = array<i64: 64, 64>}, {pipeline_mode = #tpu.pipeline_mode<synchronous>, transform_indices = @transform_15, window_bounds = array<i64: 64, 64>}, {pipeline_mode = #tpu.pipeline_mode<synchronous>, transform_indices = @transform_16, window_bounds = array<i64: 1, 64>}, {pipeline_mode = #tpu.pipeline_mode<synchronous>, transform_indices = @transform_17, window_bounds = array<i64: 64, 4>}, {pipeline_mode = #tpu.pipeline_mode<synchronous>, transform_indices = @transform_18, window_bounds = array<i64: 1, 1>}, {transform_indices = @transform_19, window_bounds = array<i64: 1, 3, 1>}]} {
    %cst = arith.constant 0.000000e+00 : f32
    %0 = vector.broadcast %cst : f32 to vector<6x64xf32>
    %c0 = arith.constant 0 : index
    %c0_0 = arith.constant 0 : index
    %1 = vector.load %arg21[%c0, %c0_0] : memref<6x64xf32, #tpu.memory_space<vmem>>, vector<6x64xf32>
    tpu.vector_store %arg21[%c0, %c0_0], %0 {strides = array<i32>} : memref<6x64xf32, #tpu.memory_space<vmem>>, vector<6x64xf32>,
    %cst_1 = arith.constant 0.000000e+00 : f32
    %2 = vector.broadcast %cst_1 : f32 to vector<6x64xf32>
    %c0_2 = arith.constant 0 : index
    %c0_3 = arith.constant 0 : index
    %3 = vector.load %arg22[%c0_2, %c0_3] : memref<6x64xf32, #tpu.memory_space<vmem>>, vector<6x64xf32>
    tpu.vector_store %arg22[%c0_2, %c0_3], %2 {strides = array<i32>} : memref<6x64xf32, #tpu.memory_space<vmem>>, vector<6x64xf32>,
    %cst_4 = arith.constant 0.000000e+00 : f32
    %4 = vector.broadcast %cst_4 : f32 to vector<6x64xf32>
    %c0_5 = arith.constant 0 : index
    %c0_6 = arith.constant 0 : index
    %5 = vector.load %arg23[%c0_5, %c0_6] : memref<6x64xf32, #tpu.memory_space<vmem>>, vector<6x64xf32>
    tpu.vector_store %arg23[%c0_5, %c0_6], %4 {strides = array<i32>} : memref<6x64xf32, #tpu.memory_space<vmem>>, vector<6x64xf32>,
    %cst_7 = arith.constant 0.000000e+00 : f32
    %6 = vector.broadcast %cst_7 : f32 to vector<6x64xf32>
    %c0_8 = arith.constant 0 : index
    %c0_9 = arith.constant 0 : index
    %7 = vector.load %arg24[%c0_8, %c0_9] : memref<6x64xf32, #tpu.memory_space<vmem>>, vector<6x64xf32>
    tpu.vector_store %arg24[%c0_8, %c0_9], %6 {strides = array<i32>} : memref<6x64xf32, #tpu.memory_space<vmem>>, vector<6x64xf32>,
    %c0_10 = arith.constant 0 : index
    %c0_11 = arith.constant 0 : index
    %c0_12 = arith.constant 0 : index
    %8 = vector.load %arg1[%c0_10, %c0_11, %c0_12] : memref<1x6x16xf32, #tpu.memory_space<vmem>>, vector<1x6x16xf32>
    %9 = vector.shape_cast %8 : vector<1x6x16xf32> to vector<6x16xf32>
    %c0_13 = arith.constant 0 : index
    %c0_14 = arith.constant 0 : index
    %10 = vector.load %arg2[%c0_13, %c0_14] : memref<16x64xbf16, #tpu.memory_space<vmem>>, vector<16x64xbf16>
    %c0_15 = arith.constant 0 : index
    %c0_16 = arith.constant 0 : index
    %11 = vector.load %arg3[%c0_15, %c0_16] : memref<16x64xbf16, #tpu.memory_space<vmem>>, vector<16x64xbf16>
    %c0_17 = arith.constant 0 : index
    %c0_18 = arith.constant 0 : index
    %12 = vector.load %arg4[%c0_17, %c0_18] : memref<16x64xbf16, #tpu.memory_space<vmem>>, vector<16x64xbf16>
    %c0_19 = arith.constant 0 : index
    %c0_20 = arith.constant 0 : index
    %13 = vector.load %arg5[%c0_19, %c0_20] : memref<1x64xf32, #tpu.memory_space<vmem>>, vector<1x64xf32>
    %14 = vector.extract_strided_slice %9 {offsets = [0, 0], sizes = [4, 16], strides = [1, 1]} : vector<6x16xf32> to vector<4x16xf32>
    %15 = arith.truncf %14 : vector<4x16xf32> to vector<4x16xbf16>
    %16 = vector.extract_strided_slice %9 {offsets = [1, 0], sizes = [4, 16], strides = [1, 1]} : vector<6x16xf32> to vector<4x16xf32>
    %17 = arith.truncf %16 : vector<4x16xf32> to vector<4x16xbf16>
    %18 = vector.extract_strided_slice %9 {offsets = [2, 0], sizes = [4, 16], strides = [1, 1]} : vector<6x16xf32> to vector<4x16xf32>
    %19 = arith.truncf %18 : vector<4x16xf32> to vector<4x16xbf16>
    %cst_21 = arith.constant dense<0.000000e+00> : vector<4x64xf32>
    %20 = tpu.matmul %15, %10, %cst_21 {dimension_numbers = #tpu.dot_dimension_numbers<[1], [0], [0], [1], [0, 0, 1, 1], [], []>} : vector<4x16xbf16>, vector<16x64xbf16>, vector<4x64xf32> -> vector<4x64xf32>
    %cst_22 = arith.constant dense<0.000000e+00> : vector<4x64xf32>
    %21 = tpu.matmul %17, %11, %cst_22 {dimension_numbers = #tpu.dot_dimension_numbers<[1], [0], [0], [1], [0, 0, 1, 1], [], []>} : vector<4x16xbf16>, vector<16x64xbf16>, vector<4x64xf32> -> vector<4x64xf32>
    %22 = arith.addf %20, %21 : vector<4x64xf32>
    %cst_23 = arith.constant dense<0.000000e+00> : vector<4x64xf32>
    %23 = tpu.matmul %19, %12, %cst_23 {dimension_numbers = #tpu.dot_dimension_numbers<[1], [0], [0], [1], [0, 0, 1, 1], [], []>} : vector<4x16xbf16>, vector<16x64xbf16>, vector<4x64xf32> -> vector<4x64xf32>
    %24 = arith.addf %22, %23 : vector<4x64xf32>
    %25 = vector.broadcast %13 : vector<1x64xf32> to vector<4x64xf32>
    %26 = arith.addf %24, %25 : vector<4x64xf32>
    %cst_24 = arith.constant 0.000000e+00 : f32
    %27 = vector.broadcast %cst_24 : f32 to vector<4x64xf32>
    %28 = arith.cmpf oge, %26, %27 : vector<4x64xf32>
    %cst_25 = arith.constant 2.000000e-01 : f32
    %29 = vector.broadcast %cst_25 : f32 to vector<4x64xf32>
    %30 = arith.mulf %29, %26 : vector<4x64xf32>
    %31 = arith.select %28, %26, %30 : vector<4x64xi1>, vector<4x64xf32>
    %c1 = arith.constant 1 : index
    %c0_26 = arith.constant 0 : index
    %32 = vector.load %arg21[%c1, %c0_26] : memref<6x64xf32, #tpu.memory_space<vmem>>, vector<4x64xf32>
    tpu.vector_store %arg21[%c1, %c0_26], %31 {strides = array<i32>} : memref<6x64xf32, #tpu.memory_space<vmem>>, vector<4x64xf32>,
    %c0_27 = arith.constant 0 : index
    %c0_28 = arith.constant 0 : index
    %33 = vector.load %arg21[%c0_27, %c0_28] : memref<6x64xf32, #tpu.memory_space<vmem>>, vector<6x64xf32>
    %c0_29 = arith.constant 0 : index
    %c0_30 = arith.constant 0 : index
    %34 = vector.load %arg6[%c0_29, %c0_30] : memref<64x64xbf16, #tpu.memory_space<vmem>>, vector<64x64xbf16>
    %c0_31 = arith.constant 0 : index
    %c0_32 = arith.constant 0 : index
    %35 = vector.load %arg7[%c0_31, %c0_32] : memref<64x64xbf16, #tpu.memory_space<vmem>>, vector<64x64xbf16>
    %c0_33 = arith.constant 0 : index
    %c0_34 = arith.constant 0 : index
    %36 = vector.load %arg8[%c0_33, %c0_34] : memref<64x64xbf16, #tpu.memory_space<vmem>>, vector<64x64xbf16>
    %c0_35 = arith.constant 0 : index
    %c0_36 = arith.constant 0 : index
    %37 = vector.load %arg9[%c0_35, %c0_36] : memref<1x64xf32, #tpu.memory_space<vmem>>, vector<1x64xf32>
    %38 = vector.extract_strided_slice %33 {offsets = [0, 0], sizes = [4, 64], strides = [1, 1]} : vector<6x64xf32> to vector<4x64xf32>
    %39 = arith.truncf %38 : vector<4x64xf32> to vector<4x64xbf16>
    %40 = vector.extract_strided_slice %33 {offsets = [1, 0], sizes = [4, 64], strides = [1, 1]} : vector<6x64xf32> to vector<4x64xf32>
    %41 = arith.truncf %40 : vector<4x64xf32> to vector<4x64xbf16>
    %42 = vector.extract_strided_slice %33 {offsets = [2, 0], sizes = [4, 64], strides = [1, 1]} : vector<6x64xf32> to vector<4x64xf32>
    %43 = arith.truncf %42 : vector<4x64xf32> to vector<4x64xbf16>
    %cst_37 = arith.constant dense<0.000000e+00> : vector<4x64xf32>
    %44 = tpu.matmul %39, %34, %cst_37 {dimension_numbers = #tpu.dot_dimension_numbers<[1], [0], [0], [1], [0, 0, 1, 1], [], []>} : vector<4x64xbf16>, vector<64x64xbf16>, vector<4x64xf32> -> vector<4x64xf32>
    %cst_38 = arith.constant dense<0.000000e+00> : vector<4x64xf32>
    %45 = tpu.matmul %41, %35, %cst_38 {dimension_numbers = #tpu.dot_dimension_numbers<[1], [0], [0], [1], [0, 0, 1, 1], [], []>} : vector<4x64xbf16>, vector<64x64xbf16>, vector<4x64xf32> -> vector<4x64xf32>
    %46 = arith.addf %44, %45 : vector<4x64xf32>
    %cst_39 = arith.constant dense<0.000000e+00> : vector<4x64xf32>
    %47 = tpu.matmul %43, %36, %cst_39 {dimension_numbers = #tpu.dot_dimension_numbers<[1], [0], [0], [1], [0, 0, 1, 1], [], []>} : vector<4x64xbf16>, vector<64x64xbf16>, vector<4x64xf32> -> vector<4x64xf32>
    %48 = arith.addf %46, %47 : vector<4x64xf32>
    %49 = vector.broadcast %37 : vector<1x64xf32> to vector<4x64xf32>
    %50 = arith.addf %48, %49 : vector<4x64xf32>
    %cst_40 = arith.constant 0.000000e+00 : f32
    %51 = vector.broadcast %cst_40 : f32 to vector<4x64xf32>
    %52 = arith.cmpf oge, %50, %51 : vector<4x64xf32>
    %cst_41 = arith.constant 2.000000e-01 : f32
    %53 = vector.broadcast %cst_41 : f32 to vector<4x64xf32>
    %54 = arith.mulf %53, %50 : vector<4x64xf32>
    %55 = arith.select %52, %50, %54 : vector<4x64xi1>, vector<4x64xf32>
    %c1_42 = arith.constant 1 : index
    %c0_43 = arith.constant 0 : index
    %56 = vector.load %arg22[%c1_42, %c0_43] : memref<6x64xf32, #tpu.memory_space<vmem>>, vector<4x64xf32>
    tpu.vector_store %arg22[%c1_42, %c0_43], %55 {strides = array<i32>} : memref<6x64xf32, #tpu.memory_space<vmem>>, vector<4x64xf32>,
    %c0_44 = arith.constant 0 : index
    %c0_45 = arith.constant 0 : index
    %57 = vector.load %arg22[%c0_44, %c0_45] : memref<6x64xf32, #tpu.memory_space<vmem>>, vector<6x64xf32>
    %c0_46 = arith.constant 0 : index
    %c0_47 = arith.constant 0 : index
    %58 = vector.load %arg10[%c0_46, %c0_47] : memref<64x64xbf16, #tpu.memory_space<vmem>>, vector<64x64xbf16>
    %c0_48 = arith.constant 0 : index
    %c0_49 = arith.constant 0 : index
    %59 = vector.load %arg11[%c0_48, %c0_49] : memref<64x64xbf16, #tpu.memory_space<vmem>>, vector<64x64xbf16>
    %c0_50 = arith.constant 0 : index
    %c0_51 = arith.constant 0 : index
    %60 = vector.load %arg12[%c0_50, %c0_51] : memref<64x64xbf16, #tpu.memory_space<vmem>>, vector<64x64xbf16>
    %c0_52 = arith.constant 0 : index
    %c0_53 = arith.constant 0 : index
    %61 = vector.load %arg13[%c0_52, %c0_53] : memref<1x64xf32, #tpu.memory_space<vmem>>, vector<1x64xf32>
    %62 = vector.extract_strided_slice %57 {offsets = [0, 0], sizes = [4, 64], strides = [1, 1]} : vector<6x64xf32> to vector<4x64xf32>
    %63 = arith.truncf %62 : vector<4x64xf32> to vector<4x64xbf16>
    %64 = vector.extract_strided_slice %57 {offsets = [1, 0], sizes = [4, 64], strides = [1, 1]} : vector<6x64xf32> to vector<4x64xf32>
    %65 = arith.truncf %64 : vector<4x64xf32> to vector<4x64xbf16>
    %66 = vector.extract_strided_slice %57 {offsets = [2, 0], sizes = [4, 64], strides = [1, 1]} : vector<6x64xf32> to vector<4x64xf32>
    %67 = arith.truncf %66 : vector<4x64xf32> to vector<4x64xbf16>
    %cst_54 = arith.constant dense<0.000000e+00> : vector<4x64xf32>
    %68 = tpu.matmul %63, %58, %cst_54 {dimension_numbers = #tpu.dot_dimension_numbers<[1], [0], [0], [1], [0, 0, 1, 1], [], []>} : vector<4x64xbf16>, vector<64x64xbf16>, vector<4x64xf32> -> vector<4x64xf32>
    %cst_55 = arith.constant dense<0.000000e+00> : vector<4x64xf32>
    %69 = tpu.matmul %65, %59, %cst_55 {dimension_numbers = #tpu.dot_dimension_numbers<[1], [0], [0], [1], [0, 0, 1, 1], [], []>} : vector<4x64xbf16>, vector<64x64xbf16>, vector<4x64xf32> -> vector<4x64xf32>
    %70 = arith.addf %68, %69 : vector<4x64xf32>
    %cst_56 = arith.constant dense<0.000000e+00> : vector<4x64xf32>
    %71 = tpu.matmul %67, %60, %cst_56 {dimension_numbers = #tpu.dot_dimension_numbers<[1], [0], [0], [1], [0, 0, 1, 1], [], []>} : vector<4x64xbf16>, vector<64x64xbf16>, vector<4x64xf32> -> vector<4x64xf32>
    %72 = arith.addf %70, %71 : vector<4x64xf32>
    %73 = vector.broadcast %61 : vector<1x64xf32> to vector<4x64xf32>
    %74 = arith.addf %72, %73 : vector<4x64xf32>
    %cst_57 = arith.constant 0.000000e+00 : f32
    %75 = vector.broadcast %cst_57 : f32 to vector<4x64xf32>
    %76 = arith.cmpf oge, %74, %75 : vector<4x64xf32>
    %cst_58 = arith.constant 2.000000e-01 : f32
    %77 = vector.broadcast %cst_58 : f32 to vector<4x64xf32>
    %78 = arith.mulf %77, %74 : vector<4x64xf32>
    %79 = arith.select %76, %74, %78 : vector<4x64xi1>, vector<4x64xf32>
    %c1_59 = arith.constant 1 : index
    %c0_60 = arith.constant 0 : index
    %80 = vector.load %arg23[%c1_59, %c0_60] : memref<6x64xf32, #tpu.memory_space<vmem>>, vector<4x64xf32>
    tpu.vector_store %arg23[%c1_59, %c0_60], %79 {strides = array<i32>} : memref<6x64xf32, #tpu.memory_space<vmem>>, vector<4x64xf32>,
    %c0_61 = arith.constant 0 : index
    %c0_62 = arith.constant 0 : index
    %81 = vector.load %arg23[%c0_61, %c0_62] : memref<6x64xf32, #tpu.memory_space<vmem>>, vector<6x64xf32>
    %c0_63 = arith.constant 0 : index
    %c0_64 = arith.constant 0 : index
    %82 = vector.load %arg14[%c0_63, %c0_64] : memref<64x64xbf16, #tpu.memory_space<vmem>>, vector<64x64xbf16>
    %c0_65 = arith.constant 0 : index
    %c0_66 = arith.constant 0 : index
    %83 = vector.load %arg15[%c0_65, %c0_66] : memref<64x64xbf16, #tpu.memory_space<vmem>>, vector<64x64xbf16>
    %c0_67 = arith.constant 0 : index
    %c0_68 = arith.constant 0 : index
    %84 = vector.load %arg16[%c0_67, %c0_68] : memref<64x64xbf16, #tpu.memory_space<vmem>>, vector<64x64xbf16>
    %c0_69 = arith.constant 0 : index
    %c0_70 = arith.constant 0 : index
    %85 = vector.load %arg17[%c0_69, %c0_70] : memref<1x64xf32, #tpu.memory_space<vmem>>, vector<1x64xf32>
    %86 = vector.extract_strided_slice %81 {offsets = [0, 0], sizes = [4, 64], strides = [1, 1]} : vector<6x64xf32> to vector<4x64xf32>
    %87 = arith.truncf %86 : vector<4x64xf32> to vector<4x64xbf16>
    %88 = vector.extract_strided_slice %81 {offsets = [1, 0], sizes = [4, 64], strides = [1, 1]} : vector<6x64xf32> to vector<4x64xf32>
    %89 = arith.truncf %88 : vector<4x64xf32> to vector<4x64xbf16>
    %90 = vector.extract_strided_slice %81 {offsets = [2, 0], sizes = [4, 64], strides = [1, 1]} : vector<6x64xf32> to vector<4x64xf32>
    %91 = arith.truncf %90 : vector<4x64xf32> to vector<4x64xbf16>
    %cst_71 = arith.constant dense<0.000000e+00> : vector<4x64xf32>
    %92 = tpu.matmul %87, %82, %cst_71 {dimension_numbers = #tpu.dot_dimension_numbers<[1], [0], [0], [1], [0, 0, 1, 1], [], []>} : vector<4x64xbf16>, vector<64x64xbf16>, vector<4x64xf32> -> vector<4x64xf32>
    %cst_72 = arith.constant dense<0.000000e+00> : vector<4x64xf32>
    %93 = tpu.matmul %89, %83, %cst_72 {dimension_numbers = #tpu.dot_dimension_numbers<[1], [0], [0], [1], [0, 0, 1, 1], [], []>} : vector<4x64xbf16>, vector<64x64xbf16>, vector<4x64xf32> -> vector<4x64xf32>
    %94 = arith.addf %92, %93 : vector<4x64xf32>
    %cst_73 = arith.constant dense<0.000000e+00> : vector<4x64xf32>
    %95 = tpu.matmul %91, %84, %cst_73 {dimension_numbers = #tpu.dot_dimension_numbers<[1], [0], [0], [1], [0, 0, 1, 1], [], []>} : vector<4x64xbf16>, vector<64x64xbf16>, vector<4x64xf32> -> vector<4x64xf32>
    %96 = arith.addf %94, %95 : vector<4x64xf32>
    %97 = vector.broadcast %85 : vector<1x64xf32> to vector<4x64xf32>
    %98 = arith.addf %96, %97 : vector<4x64xf32>
    %cst_74 = arith.constant 0.000000e+00 : f32
    %99 = vector.broadcast %cst_74 : f32 to vector<4x64xf32>
    %100 = arith.cmpf oge, %98, %99 : vector<4x64xf32>
    %cst_75 = arith.constant 2.000000e-01 : f32
    %101 = vector.broadcast %cst_75 : f32 to vector<4x64xf32>
    %102 = arith.mulf %101, %98 : vector<4x64xf32>
    %103 = arith.select %100, %98, %102 : vector<4x64xi1>, vector<4x64xf32>
    %c1_76 = arith.constant 1 : index
    %c0_77 = arith.constant 0 : index
    %104 = vector.load %arg24[%c1_76, %c0_77] : memref<6x64xf32, #tpu.memory_space<vmem>>, vector<4x64xf32>
    tpu.vector_store %arg24[%c1_76, %c0_77], %103 {strides = array<i32>} : memref<6x64xf32, #tpu.memory_space<vmem>>, vector<4x64xf32>,
    %c0_78 = arith.constant 0 : index
    %c0_79 = arith.constant 0 : index
    %105 = vector.load %arg24[%c0_78, %c0_79] : memref<6x64xf32, #tpu.memory_space<vmem>>, vector<6x64xf32>
    %c0_80 = arith.constant 0 : index
    %c0_81 = arith.constant 0 : index
    %106 = vector.load %arg18[%c0_80, %c0_81] : memref<64x4xbf16, #tpu.memory_space<vmem>>, vector<64x4xbf16>
    %cst_82 = arith.constant 0.000000e+00 : f32
    %107 = vector.broadcast %cst_82 : f32 to vector<3x1xf32>
    %108 = vector.extract_strided_slice %105 {offsets = [0, 0], sizes = [3, 64], strides = [1, 1]} : vector<6x64xf32> to vector<3x64xf32>
    %109 = arith.truncf %108 : vector<3x64xf32> to vector<3x64xbf16>
    %110 = vector.extract_strided_slice %106 {offsets = [0, 0], sizes = [64, 1], strides = [1, 1]} : vector<64x4xbf16> to vector<64x1xbf16>
    %cst_83 = arith.constant dense<0.000000e+00> : vector<3x1xf32>
    %111 = tpu.matmul %109, %110, %cst_83 {dimension_numbers = #tpu.dot_dimension_numbers<[1], [0], [0], [1], [0, 0, 1, 1], [], []>} : vector<3x64xbf16>, vector<64x1xbf16>, vector<3x1xf32> -> vector<3x1xf32>
    %112 = arith.addf %107, %111 : vector<3x1xf32>
    %113 = vector.extract_strided_slice %105 {offsets = [1, 0], sizes = [3, 64], strides = [1, 1]} : vector<6x64xf32> to vector<3x64xf32>
    %114 = arith.truncf %113 : vector<3x64xf32> to vector<3x64xbf16>
    %115 = vector.extract_strided_slice %106 {offsets = [0, 1], sizes = [64, 1], strides = [1, 1]} : vector<64x4xbf16> to vector<64x1xbf16>
    %cst_84 = arith.constant dense<0.000000e+00> : vector<3x1xf32>
    %116 = tpu.matmul %114, %115, %cst_84 {dimension_numbers = #tpu.dot_dimension_numbers<[1], [0], [0], [1], [0, 0, 1, 1], [], []>} : vector<3x64xbf16>, vector<64x1xbf16>, vector<3x1xf32> -> vector<3x1xf32>
    %117 = arith.addf %112, %116 : vector<3x1xf32>
    %118 = vector.extract_strided_slice %105 {offsets = [2, 0], sizes = [3, 64], strides = [1, 1]} : vector<6x64xf32> to vector<3x64xf32>
    %119 = arith.truncf %118 : vector<3x64xf32> to vector<3x64xbf16>
    %120 = vector.extract_strided_slice %106 {offsets = [0, 2], sizes = [64, 1], strides = [1, 1]} : vector<64x4xbf16> to vector<64x1xbf16>
    %cst_85 = arith.constant dense<0.000000e+00> : vector<3x1xf32>
    %121 = tpu.matmul %119, %120, %cst_85 {dimension_numbers = #tpu.dot_dimension_numbers<[1], [0], [0], [1], [0, 0, 1, 1], [], []>} : vector<3x64xbf16>, vector<64x1xbf16>, vector<3x1xf32> -> vector<3x1xf32>
    %122 = arith.addf %117, %121 : vector<3x1xf32>
    %123 = vector.extract_strided_slice %105 {offsets = [3, 0], sizes = [3, 64], strides = [1, 1]} : vector<6x64xf32> to vector<3x64xf32>
    %124 = arith.truncf %123 : vector<3x64xf32> to vector<3x64xbf16>
    %125 = vector.extract_strided_slice %106 {offsets = [0, 3], sizes = [64, 1], strides = [1, 1]} : vector<64x4xbf16> to vector<64x1xbf16>
    %cst_86 = arith.constant dense<0.000000e+00> : vector<3x1xf32>
    %126 = tpu.matmul %124, %125, %cst_86 {dimension_numbers = #tpu.dot_dimension_numbers<[1], [0], [0], [1], [0, 0, 1, 1], [], []>} : vector<3x64xbf16>, vector<64x1xbf16>, vector<3x1xf32> -> vector<3x1xf32>
    %127 = arith.addf %122, %126 : vector<3x1xf32>
    %c0_87 = arith.constant 0 : index
    %c0_88 = arith.constant 0 : index
    %128 = vector.load %arg19[%c0_87, %c0_88] : memref<1x1xf32, #tpu.memory_space<vmem>>, vector<1x1xf32>
    %129 = vector.broadcast %128 : vector<1x1xf32> to vector<3x1xf32>
    %130 = arith.addf %127, %129 : vector<3x1xf32>
    %c0_89 = arith.constant 0 : index
    %c0_90 = arith.constant 0 : index
    %c0_91 = arith.constant 0 : index
    %131 = vector.load %arg20[%c0_89, %c0_90, %c0_91] : memref<1x3x1xf32, #tpu.memory_space<vmem>>, vector<1x3x1xf32>
    %132 = vector.shape_cast %131 : vector<1x3x1xf32> to vector<3x1xf32>
    %133 = vector.shape_cast %130 : vector<3x1xf32> to vector<1x3x1xf32>
    tpu.vector_store %arg20[%c0_89, %c0_90, %c0_91], %133 {strides = array<i32>} : memref<1x3x1xf32, #tpu.memory_space<vmem>>, vector<1x3x1xf32>,
    return
  }
  func.func @transform_0(%arg0: i32) -> (i32, i32, i32) {
    %c0_i32 = arith.constant 0 : i32
    %c0_i32_0 = arith.constant 0 : i32
    %c0_i32_1 = arith.constant 0 : i32
    return %arg0, %c0_i32, %c0_i32_0 : i32, i32, i32
  }
  func.func @transform_1(%arg0: i32) -> (i32, i32) {
    %c0_i32 = arith.constant 0 : i32
    %c0_i32_0 = arith.constant 0 : i32
    %c0_i32_1 = arith.constant 0 : i32
    return %c0_i32, %c0_i32_0 : i32, i32
  }
  func.func @transform_2(%arg0: i32) -> (i32, i32) {
    %c0_i32 = arith.constant 0 : i32
    %c0_i32_0 = arith.constant 0 : i32
    %c0_i32_1 = arith.constant 0 : i32
    return %c0_i32, %c0_i32_0 : i32, i32
  }
  func.func @transform_3(%arg0: i32) -> (i32, i32) {
    %c0_i32 = arith.constant 0 : i32
    %c0_i32_0 = arith.constant 0 : i32
    %c0_i32_1 = arith.constant 0 : i32
    return %c0_i32, %c0_i32_0 : i32, i32
  }
  func.func @transform_4(%arg0: i32) -> (i32, i32) {
    %c0_i32 = arith.constant 0 : i32
    %c0_i32_0 = arith.constant 0 : i32
    %c0_i32_1 = arith.constant 0 : i32
    return %c0_i32, %c0_i32_0 : i32, i32
  }
  func.func @transform_5(%arg0: i32) -> (i32, i32) {
    %c0_i32 = arith.constant 0 : i32
    %c0_i32_0 = arith.constant 0 : i32
    %c0_i32_1 = arith.constant 0 : i32
    return %c0_i32, %c0_i32_0 : i32, i32
  }
  func.func @transform_6(%arg0: i32) -> (i32, i32) {
    %c0_i32 = arith.constant 0 : i32
    %c0_i32_0 = arith.constant 0 : i32
    %c0_i32_1 = arith.constant 0 : i32
    return %c0_i32, %c0_i32_0 : i32, i32
  }
  func.func @transform_7(%arg0: i32) -> (i32, i32) {
    %c0_i32 = arith.constant 0 : i32
    %c0_i32_0 = arith.constant 0 : i32
    %c0_i32_1 = arith.constant 0 : i32
    return %c0_i32, %c0_i32_0 : i32, i32
  }
  func.func @transform_8(%arg0: i32) -> (i32, i32) {
    %c0_i32 = arith.constant 0 : i32
    %c0_i32_0 = arith.constant 0 : i32
    %c0_i32_1 = arith.constant 0 : i32
    return %c0_i32, %c0_i32_0 : i32, i32
  }
  func.func @transform_9(%arg0: i32) -> (i32, i32) {
    %c0_i32 = arith.constant 0 : i32
    %c0_i32_0 = arith.constant 0 : i32
    %c0_i32_1 = arith.constant 0 : i32
    return %c0_i32, %c0_i32_0 : i32, i32
  }
  func.func @transform_10(%arg0: i32) -> (i32, i32) {
    %c0_i32 = arith.constant 0 : i32
    %c0_i32_0 = arith.constant 0 : i32
    %c0_i32_1 = arith.constant 0 : i32
    return %c0_i32, %c0_i32_0 : i32, i32
  }
  func.func @transform_11(%arg0: i32) -> (i32, i32) {
    %c0_i32 = arith.constant 0 : i32
    %c0_i32_0 = arith.constant 0 : i32
    %c0_i32_1 = arith.constant 0 : i32
    return %c0_i32, %c0_i32_0 : i32, i32
  }
  func.func @transform_12(%arg0: i32) -> (i32, i32) {
    %c0_i32 = arith.constant 0 : i32
    %c0_i32_0 = arith.constant 0 : i32
    %c0_i32_1 = arith.constant 0 : i32
    return %c0_i32, %c0_i32_0 : i32, i32
  }
  func.func @transform_13(%arg0: i32) -> (i32, i32) {
    %c0_i32 = arith.constant 0 : i32
    %c0_i32_0 = arith.constant 0 : i32
    %c0_i32_1 = arith.constant 0 : i32
    return %c0_i32, %c0_i32_0 : i32, i32
  }
  func.func @transform_14(%arg0: i32) -> (i32, i32) {
    %c0_i32 = arith.constant 0 : i32
    %c0_i32_0 = arith.constant 0 : i32
    %c0_i32_1 = arith.constant 0 : i32
    return %c0_i32, %c0_i32_0 : i32, i32
  }
  func.func @transform_15(%arg0: i32) -> (i32, i32) {
    %c0_i32 = arith.constant 0 : i32
    %c0_i32_0 = arith.constant 0 : i32
    %c0_i32_1 = arith.constant 0 : i32
    return %c0_i32, %c0_i32_0 : i32, i32
  }
  func.func @transform_16(%arg0: i32) -> (i32, i32) {
    %c0_i32 = arith.constant 0 : i32
    %c0_i32_0 = arith.constant 0 : i32
    %c0_i32_1 = arith.constant 0 : i32
    return %c0_i32, %c0_i32_0 : i32, i32
  }
  func.func @transform_17(%arg0: i32) -> (i32, i32) {
    %c0_i32 = arith.constant 0 : i32
    %c0_i32_0 = arith.constant 0 : i32
    %c0_i32_1 = arith.constant 0 : i32
    return %c0_i32, %c0_i32_0 : i32, i32
  }
  func.func @transform_18(%arg0: i32) -> (i32, i32) {
    %c0_i32 = arith.constant 0 : i32
    %c0_i32_0 = arith.constant 0 : i32
    %c0_i32_1 = arith.constant 0 : i32
    return %c0_i32, %c0_i32_0 : i32, i32
  }
  func.func @transform_19(%arg0: i32) -> (i32, i32, i32) {
    %c0_i32 = arith.constant 0 : i32
    %c0_i32_0 = arith.constant 0 : i32
    %c0_i32_1 = arith.constant 0 : i32
    return %arg0, %c0_i32, %c0_i32_0 : i32, i32, i32
  }
}

</mosaic_0001>

<llo_original>
// kernel: discriminator_forward.1
$region0: #{discriminator_forward.1}
  #allocation0 [shape = 'u32[]', space=smem, size = 0x4, offset = 0x4, fixed_abs, tag = 'smem constant byte address 0x4 - core index']
  #allocation1 [shape = 'u32[144,128]{1,0:T(1,128)}', space=vmem, size = 0x12000, scoped, tag = 'internal scratch']
  #allocation2 [shape = 'f32[6,64]{1,0:T(8,128)}', space=vmem, size = 0x1000, scoped, tag = 'scratch operand']
  #allocation3 [shape = 'f32[6,64]{1,0:T(8,128)}', space=vmem, size = 0x1000, scoped, tag = 'scratch operand']
  #allocation4 [shape = 'f32[6,64]{1,0:T(8,128)}', space=vmem, size = 0x1000, scoped, tag = 'scratch operand']
  #allocation5 [shape = 'f32[6,64]{1,0:T(8,128)}', space=vmem, size = 0x1000, scoped, tag = 'scratch operand']
  #allocation6 [shape = 'f32[1,1]{1,0:T(1,128)S(1)}', space=vmem, size = 0x200, scoped, tag = 'scoped memory for discriminator_forward.1']
  %s0 = inlined_call_operand.vmem [shape: f32[2,6,16], index: 0, kind: input, shape index: {}]
  %s1 = inlined_call_operand.hbm [shape: bf16[16,64], index: 1, kind: input, shape index: {}]
  %s2 = inlined_call_operand.hbm [shape: bf16[16,64], index: 2, kind: input, shape index: {}]
  %s3 = inlined_call_operand.hbm [shape: bf16[16,64], index: 3, kind: input, shape index: {}]
  %s4 = inlined_call_operand.vmem [shape: f32[1,64], index: 4, kind: input, shape index: {}]
  %s5 = inlined_call_operand.vmem [shape: bf16[64,64], index: 5, kind: input, shape index: {}]
  %s6 = inlined_call_operand.vmem [shape: bf16[64,64], index: 6, kind: input, shape index: {}]
  %s7 = inlined_call_operand.vmem [shape: bf16[64,64], index: 7, kind: input, shape index: {}]
  %s8 = inlined_call_operand.hbm [shape: f32[1,64], index: 8, kind: input, shape index: {}]
  %s9 = inlined_call_operand.hbm [shape: bf16[64,64], index: 9, kind: input, shape index: {}]
  %s10 = inlined_call_operand.hbm [shape: bf16[64,64], index: 10, kind: input, shape index: {}]
  %s11 = inlined_call_operand.hbm [shape: bf16[64,64], index: 11, kind: input, shape index: {}]
  %s12 = inlined_call_operand.hbm [shape: f32[1,64], index: 12, kind: input, shape index: {}]
  %s13 = inlined_call_operand.vmem [shape: bf16[64,64], index: 13, kind: input, shape index: {}]
  %s14 = inlined_call_operand.hbm [shape: bf16[64,64], index: 14, kind: input, shape index: {}]
  %s15 = inlined_call_operand.hbm [shape: bf16[64,64], index: 15, kind: input, shape index: {}]
  %s16 = inlined_call_operand.vmem [shape: f32[1,64], index: 16, kind: input, shape index: {}]
  %s17 = inlined_call_operand.vmem [shape: bf16[64,4], index: 17, kind: input, shape index: {}]
  %s18 = inlined_call_operand.<no memory space> [shape: f32[1,1], index: 18, kind: input, shape index: {}]
  %s19 = inlined_call_operand.vmem [shape: f32[2,3,1], index: 19, kind: output, shape index: {}]
  %s20 = sld [smem:[#allocation0]]
  $region149: #{discriminator_forward.1} parent=0
    _
  %s22 = ssub.s32 1, %s20
  %s23 = scalar_select 0, %s22, %s20
  %v24 = vstv %s18
  %25 = vst [vmem:[#allocation6] sm:$0x1] %v24
  $region1: #{discriminator_forward.1} parent=0
    #allocation7 [shape = 'u8[4096]{0}', space=vmem, size = 0x1000, scoped, tag = 'input window, operand 1, single buffered']
    #allocation8 [shape = 's32[2]{0}', space=sflag, size = 0x8, scoped, tag = 'scoped memory for discriminator_forward.1']
    #allocation9 [shape = 'u8[4096]{0}', space=vmem, size = 0x1000, scoped, tag = 'input window, operand 2, single buffered']
    #allocation10 [shape = 's32[1]{0}', space=sflag, size = 0x4, scoped, tag = 'scoped memory for discriminator_forward.1']
    #allocation11 [shape = 'u8[4096]{0}', space=vmem, size = 0x1000, scoped, tag = 'input window, operand 3, single buffered']
    #allocation12 [shape = 'u8[512]{0}', space=vmem, size = 0x400, scoped, tag = 'input window, operand 8, single buffered']
    #allocation13 [shape = 's32[1]{0}', space=sflag, size = 0x4, scoped, tag = 'scoped memory for discriminator_forward.1']
    #allocation14 [shape = 'u8[16384]{0}', space=vmem, size = 0x4000, scoped, tag = 'input window, operand 9, single buffered']
    #allocation15 [shape = 'u8[16384]{0}', space=vmem, size = 0x4000, scoped, tag = 'input window, operand 10, single buffered']
    #allocation16 [shape = 's32[1]{0}', space=sflag, size = 0x4, scoped, tag = 'scoped memory for discriminator_forward.1']
    #allocation17 [shape = 'u8[16384]{0}', space=vmem, size = 0x4000, scoped, tag = 'input window, operand 11, single buffered']
    #allocation18 [shape = 'u8[512]{0}', space=vmem, size = 0x400, scoped, tag = 'input window, operand 12, single buffered']
    #allocation19 [shape = 's32[1]{0}', space=sflag, size = 0x4, scoped, tag = 'scoped memory for discriminator_forward.1']
    #allocation20 [shape = 'u8[16384]{0}', space=vmem, size = 0x4000, scoped, tag = 'input window, operand 14, single buffered']
    #allocation21 [shape = 'u8[16384]{0}', space=vmem, size = 0x4000, scoped, tag = 'input window, operand 15, single buffered']
    #allocation22 [shape = 's32[1]{0}', space=sflag, size = 0x4, scoped, tag = 'scoped memory for discriminator_forward.1']
    %26 = vsyncpa [#allocation8], 0
    %27 = vsyncpa [#allocation10], 0
    %28 = vsyncpa [#allocation13], 0
    %29 = vsyncpa [#allocation16], 0
    %30 = vsyncpa [#allocation19], 0
    %31 = vsyncpa [#allocation22], 0
    loop: start=0, step=1, limit=4
    $region2: #{discriminator_forward.1} parent=1 // loop_pre_header
      _
    $region3: #{discriminator_forward.1} parent=1 // loop_header
      %s33 = sphi 0, %s37
      %p34 = scmp.ge.s32.totalorder %s33, 4
      %s43 = sphi 0, %s45
      %s46 = sphi 0, %s43
      %s47 = sphi 0, %s46
      %s63 = sphi 0, %s47
      %s67 = sphi 0, %s67
      %s69 = sphi 0, %s67
      %s70 = sphi 0, %s69
      %s84 = sphi 0, %s70
      %s88 = sphi 0, %s88
      %s90 = sphi 0, %s88
      %s91 = sphi 0, %s90
      %s105 = sphi 0, %s91
      %s109 = sphi 0, %s109
      %s111 = sphi 0, %s109
      %s112 = sphi 0, %s111
      %s126 = sphi 0, %s112
      %s130 = sphi 0, %s130
      %s132 = sphi 0, %s130
      %s133 = sphi 0, %s132
      %s147 = sphi 0, %s133
      %s151 = sphi 0, %s151
      %s153 = sphi 0, %s151
      %s154 = sphi 0, %s153
      %s168 = sphi 0, %s154
      %s172 = sphi 0, %s172
      %s174 = sphi 0, %s172
      %s175 = sphi 0, %s174
      %s189 = sphi 0, %s175
      %s193 = sphi 0, %s193
      %s195 = sphi 0, %s193
      %s196 = sphi 0, %s195
      %s210 = sphi 0, %s196
      %s214 = sphi 0, %s214
      %s216 = sphi 0, %s214
      %s217 = sphi 0, %s216
      %s231 = sphi 0, %s217
      %s235 = sphi 0, %s235
      %s237 = sphi 0, %s235
      %s238 = sphi 0, %s237
      %s252 = sphi 0, %s238
      %s256 = sphi 0, %s256
      %s258 = sphi 0, %s256
      %s259 = sphi 0, %s258
      %s273 = sphi 0, %s259
      %s277 = sphi 0, %s277
      %s279 = sphi 0, %s277
      %s280 = sphi 0, %s279
      %s294 = sphi 0, %s280
      %s298 = sphi 0, %s298
      %s300 = sphi 0, %s298
      %s301 = sphi 0, %s300
      %s315 = sphi 0, %s301
      %s319 = sphi 0, %s319
      %s321 = sphi 0, %s319
      %s322 = sphi 0, %s321
      %s336 = sphi 0, %s322
      %s340 = sphi 0, %s340
      %s342 = sphi 0, %s340
      %s343 = sphi 0, %s342
      %s357 = sphi 0, %s343
      %s361 = sphi 0, %s361
      %s363 = sphi 0, %s361
      %s364 = sphi 0, %s363
      %s378 = sphi 0, %s364
      %s382 = sphi 0, %s382
      %s384 = sphi 0, %s382
      %s385 = sphi 0, %s384
      %s399 = sphi 0, %s385
      %s403 = sphi 0, %s403
      %s405 = sphi 0, %s403
      %s406 = sphi 0, %s405
      %s420 = sphi 0, %s406
      %s424 = sphi 0, %s424
      %s426 = sphi 0, %s424
      %s427 = sphi 0, %s426
      %s441 = sphi 0, %s427
      %s447 = sphi 0, %s449
      %s450 = sphi 0, %s447
      %s451 = sphi 0, %s450
      %s467 = sphi 0, %s451
    $region4: #{discriminator_forward.1} parent=1 // loop_header_branch
      %36 = sbr.rel (%p34) target = $region8
    $region5: #{discriminator_forward.1} parent=1 // loop_body
      %s38 = ssub.s32 %s33, 1
      %s39 = ssub.s32 %s33, 2
      %s40 = sadd.s32 %s33, 1
      %s41 = ssub.s32 %s33, %s40
      %p42 = scmp.eq.s32.totalorder %s41, 0
      %s44 = sadd.s32 %s43, 1
      %s45 = scalar_select %p42, %s43, %s44
      %p48 = pneg %p42
      %p49 = scmp.eq.s32.totalorder %s33, 1
      %p50 = por %p48, %p49
      %p51 = scmp.ne.s32.totalorder %s43, %s46
      %p52 = scmp.eq.s32.totalorder %s33, 0
      %p53 = por %p51, %p52
      %p54 = scmp.ne.s32.totalorder %s43, %s46
      %p55 = scmp.eq.s32.totalorder %s38, 1
      %p56 = por %p54, %p55
      %p57 = scmp.ne.s32.totalorder %s46, %s47
      %p58 = scmp.eq.s32.totalorder %s38, 0
      %p59 = por %p57, %p58
      %p60 = scmp.ne.s32.totalorder %s46, %s47
      %p61 = scmp.eq.s32.totalorder %s39, 1
      %p62 = por %p60, %p61
      %p64 = scmp.ne.s32.totalorder %s47, %s63
      %p65 = scmp.eq.s32.totalorder %s39, 0
      %p66 = por %p64, %p65
      %s68 = sadd.s32 %s67, 1
      %p71 = scmp.eq.s32.totalorder %s33, 1
      %p72 = scmp.ne.s32.totalorder %s67, %s69
      %p73 = scmp.eq.s32.totalorder %s33, 0
      %p74 = por %p72, %p73
      %p75 = scmp.ne.s32.totalorder %s67, %s69
      %p76 = scmp.eq.s32.totalorder %s38, 1
      %p77 = por %p75, %p76
      %p78 = scmp.ne.s32.totalorder %s69, %s70
      %p79 = scmp.eq.s32.totalorder %s38, 0
      %p80 = por %p78, %p79
      %p81 = scmp.ne.s32.totalorder %s69, %s70
      %p82 = scmp.eq.s32.totalorder %s39, 1
      %p83 = por %p81, %p82
      %p85 = scmp.ne.s32.totalorder %s70, %s84
      %p86 = scmp.eq.s32.totalorder %s39, 0
      %p87 = por %p85, %p86
      %s89 = sadd.s32 %s88, 1
      %p92 = scmp.eq.s32.totalorder %s33, 1
      %p93 = scmp.ne.s32.totalorder %s88, %s90
      %p94 = scmp.eq.s32.totalorder %s33, 0
      %p95 = por %p93, %p94
      %p96 = scmp.ne.s32.totalorder %s88, %s90
      %p97 = scmp.eq.s32.totalorder %s38, 1
      %p98 = por %p96, %p97
      %p99 = scmp.ne.s32.totalorder %s90, %s91
      %p100 = scmp.eq.s32.totalorder %s38, 0
      %p101 = por %p99, %p100
      %p102 = scmp.ne.s32.totalorder %s90, %s91
      %p103 = scmp.eq.s32.totalorder %s39, 1
      %p104 = por %p102, %p103
      %p106 = scmp.ne.s32.totalorder %s91, %s105
      %p107 = scmp.eq.s32.totalorder %s39, 0
      %p108 = por %p106, %p107
      %s110 = sadd.s32 %s109, 1
      %p113 = scmp.eq.s32.totalorder %s33, 1
      %p114 = scmp.ne.s32.totalorder %s109, %s111
      %p115 = scmp.eq.s32.totalorder %s33, 0
      %p116 = por %p114, %p115
      %p117 = scmp.ne.s32.totalorder %s109, %s111
      %p118 = scmp.eq.s32.totalorder %s38, 1
      %p119 = por %p117, %p118
      %p120 = scmp.ne.s32.totalorder %s111, %s112
      %p121 = scmp.eq.s32.totalorder %s38, 0
      %p122 = por %p120, %p121
      %p123 = scmp.ne.s32.totalorder %s111, %s112
      %p124 = scmp.eq.s32.totalorder %s39, 1
      %p125 = por %p123, %p124
      %p127 = scmp.ne.s32.totalorder %s112, %s126
      %p128 = scmp.eq.s32.totalorder %s39, 0
      %p129 = por %p127, %p128
      %s131 = sadd.s32 %s130, 1
      %p134 = scmp.eq.s32.totalorder %s33, 1
      %p135 = scmp.ne.s32.totalorder %s130, %s132
      %p136 = scmp.eq.s32.totalorder %s33, 0
      %p137 = por %p135, %p136
      %p138 = scmp.ne.s32.totalorder %s130, %s132
      %p139 = scmp.eq.s32.totalorder %s38, 1
      %p140 = por %p138, %p139
      %p141 = scmp.ne.s32.totalorder %s132, %s133
      %p142 = scmp.eq.s32.totalorder %s38, 0
      %p143 = por %p141, %p142
      %p144 = scmp.ne.s32.totalorder %s132, %s133
      %p145 = scmp.eq.s32.totalorder %s39, 1
      %p146 = por %p144, %p145
      %p148 = scmp.ne.s32.totalorder %s133, %s147
      %p149 = scmp.eq.s32.totalorder %s39, 0
      %p150 = por %p148, %p149
      %s152 = sadd.s32 %s151, 1
      %p155 = scmp.eq.s32.totalorder %s33, 1
      %p156 = scmp.ne.s32.totalorder %s151, %s153
      %p157 = scmp.eq.s32.totalorder %s33, 0
      %p158 = por %p156, %p157
      %p159 = scmp.ne.s32.totalorder %s151, %s153
      %p160 = scmp.eq.s32.totalorder %s38, 1
      %p161 = por %p159, %p160
      %p162 = scmp.ne.s32.totalorder %s153, %s154
      %p163 = scmp.eq.s32.totalorder %s38, 0
      %p164 = por %p162, %p163
      %p165 = scmp.ne.s32.totalorder %s153, %s154
      %p166 = scmp.eq.s32.totalorder %s39, 1
      %p167 = por %p165, %p166
      %p169 = scmp.ne.s32.totalorder %s154, %s168
      %p170 = scmp.eq.s32.totalorder %s39, 0
      %p171 = por %p169, %p170
      %s173 = sadd.s32 %s172, 1
      %p176 = scmp.eq.s32.totalorder %s33, 1
      %p177 = scmp.ne.s32.totalorder %s172, %s174
      %p178 = scmp.eq.s32.totalorder %s33, 0
      %p179 = por %p177, %p178
      %p180 = scmp.ne.s32.totalorder %s172, %s174
      %p181 = scmp.eq.s32.totalorder %s38, 1
      %p182 = por %p180, %p181
      %p183 = scmp.ne.s32.totalorder %s174, %s175
      %p184 = scmp.eq.s32.totalorder %s38, 0
      %p185 = por %p183, %p184
      %p186 = scmp.ne.s32.totalorder %s174, %s175
      %p187 = scmp.eq.s32.totalorder %s39, 1
      %p188 = por %p186, %p187
      %p190 = scmp.ne.s32.totalorder %s175, %s189
      %p191 = scmp.eq.s32.totalorder %s39, 0
      %p192 = por %p190, %p191
      %s194 = sadd.s32 %s193, 1
      %p197 = scmp.eq.s32.totalorder %s33, 1
      %p198 = scmp.ne.s32.totalorder %s193, %s195
      %p199 = scmp.eq.s32.totalorder %s33, 0
      %p200 = por %p198, %p199
      %p201 = scmp.ne.s32.totalorder %s193, %s195
      %p202 = scmp.eq.s32.totalorder %s38, 1
      %p203 = por %p201, %p202
      %p204 = scmp.ne.s32.totalorder %s195, %s196
      %p205 = scmp.eq.s32.totalorder %s38, 0
      %p206 = por %p204, %p205
      %p207 = scmp.ne.s32.totalorder %s195, %s196
      %p208 = scmp.eq.s32.totalorder %s39, 1
      %p209 = por %p207, %p208
      %p211 = scmp.ne.s32.totalorder %s196, %s210
      %p212 = scmp.eq.s32.totalorder %s39, 0
      %p213 = por %p211, %p212
      %s215 = sadd.s32 %s214, 1
      %p218 = scmp.eq.s32.totalorder %s33, 1
      %p219 = scmp.ne.s32.totalorder %s214, %s216
      %p220 = scmp.eq.s32.totalorder %s33, 0
      %p221 = por %p219, %p220
      %p222 = scmp.ne.s32.totalorder %s214, %s216
      %p223 = scmp.eq.s32.totalorder %s38, 1
      %p224 = por %p222, %p223
      %p225 = scmp.ne.s32.totalorder %s216, %s217
      %p226 = scmp.eq.s32.totalorder %s38, 0
      %p227 = por %p225, %p226
      %p228 = scmp.ne.s32.totalorder %s216, %s217
      %p229 = scmp.eq.s32.totalorder %s39, 1
      %p230 = por %p228, %p229
      %p232 = scmp.ne.s32.totalorder %s217, %s231
      %p233 = scmp.eq.s32.totalorder %s39, 0
      %p234 = por %p232, %p233
      %s236 = sadd.s32 %s235, 1
      %p239 = scmp.eq.s32.totalorder %s33, 1
      %p240 = scmp.ne.s32.totalorder %s235, %s237
      %p241 = scmp.eq.s32.totalorder %s33, 0
      %p242 = por %p240, %p241
      %p243 = scmp.ne.s32.totalorder %s235, %s237
      %p244 = scmp.eq.s32.totalorder %s38, 1
      %p245 = por %p243, %p244
      %p246 = scmp.ne.s32.totalorder %s237, %s238
      %p247 = scmp.eq.s32.totalorder %s38, 0
      %p248 = por %p246, %p247
      %p249 = scmp.ne.s32.totalorder %s237, %s238
      %p250 = scmp.eq.s32.totalorder %s39, 1
      %p251 = por %p249, %p250
      %p253 = scmp.ne.s32.totalorder %s238, %s252
      %p254 = scmp.eq.s32.totalorder %s39, 0
      %p255 = por %p253, %p254
      %s257 = sadd.s32 %s256, 1
      %p260 = scmp.eq.s32.totalorder %s33, 1
      %p261 = scmp.ne.s32.totalorder %s256, %s258
      %p262 = scmp.eq.s32.totalorder %s33, 0
      %p263 = por %p261, %p262
      %p264 = scmp.ne.s32.totalorder %s256, %s258
      %p265 = scmp.eq.s32.totalorder %s38, 1
      %p266 = por %p264, %p265
      %p267 = scmp.ne.s32.totalorder %s258, %s259
      %p268 = scmp.eq.s32.totalorder %s38, 0
      %p269 = por %p267, %p268
      %p270 = scmp.ne.s32.totalorder %s258, %s259
      %p271 = scmp.eq.s32.totalorder %s39, 1
      %p272 = por %p270, %p271
      %p274 = scmp.ne.s32.totalorder %s259, %s273
      %p275 = scmp.eq.s32.totalorder %s39, 0
      %p276 = por %p274, %p275
      %s278 = sadd.s32 %s277, 1
      %p281 = scmp.eq.s32.totalorder %s33, 1
      %p282 = scmp.ne.s32.totalorder %s277, %s279
      %p283 = scmp.eq.s32.totalorder %s33, 0
      %p284 = por %p282, %p283
      %p285 = scmp.ne.s32.totalorder %s277, %s279
      %p286 = scmp.eq.s32.totalorder %s38, 1
      %p287 = por %p285, %p286
      %p288 = scmp.ne.s32.totalorder %s279, %s280
      %p289 = scmp.eq.s32.totalorder %s38, 0
      %p290 = por %p288, %p289
      %p291 = scmp.ne.s32.totalorder %s279, %s280
      %p292 = scmp.eq.s32.totalorder %s39, 1
      %p293 = por %p291, %p292
      %p295 = scmp.ne.s32.totalorder %s280, %s294
      %p296 = scmp.eq.s32.totalorder %s39, 0
      %p297 = por %p295, %p296
      %s299 = sadd.s32 %s298, 1
      %p302 = scmp.eq.s32.totalorder %s33, 1
      %p303 = scmp.ne.s32.totalorder %s298, %s300
      %p304 = scmp.eq.s32.totalorder %s33, 0
      %p305 = por %p303, %p304
      %p306 = scmp.ne.s32.totalorder %s298, %s300
      %p307 = scmp.eq.s32.totalorder %s38, 1
      %p308 = por %p306, %p307
      %p309 = scmp.ne.s32.totalorder %s300, %s301
      %p310 = scmp.eq.s32.totalorder %s38, 0
      %p311 = por %p309, %p310
      %p312 = scmp.ne.s32.totalorder %s300, %s301
      %p313 = scmp.eq.s32.totalorder %s39, 1
      %p314 = por %p312, %p313
      %p316 = scmp.ne.s32.totalorder %s301, %s315
      %p317 = scmp.eq.s32.totalorder %s39, 0
      %p318 = por %p316, %p317
      %s320 = sadd.s32 %s319, 1
      %p323 = scmp.eq.s32.totalorder %s33, 1
      %p324 = scmp.ne.s32.totalorder %s319, %s321
      %p325 = scmp.eq.s32.totalorder %s33, 0
      %p326 = por %p324, %p325
      %p327 = scmp.ne.s32.totalorder %s319, %s321
      %p328 = scmp.eq.s32.totalorder %s38, 1
      %p329 = por %p327, %p328
      %p330 = scmp.ne.s32.totalorder %s321, %s322
      %p331 = scmp.eq.s32.totalorder %s38, 0
      %p332 = por %p330, %p331
      %p333 = scmp.ne.s32.totalorder %s321, %s322
      %p334 = scmp.eq.s32.totalorder %s39, 1
      %p335 = por %p333, %p334
      %p337 = scmp.ne.s32.totalorder %s322, %s336
      %p338 = scmp.eq.s32.totalorder %s39, 0
      %p339 = por %p337, %p338
      %s341 = sadd.s32 %s340, 1
      %p344 = scmp.eq.s32.totalorder %s33, 1
      %p345 = scmp.ne.s32.totalorder %s340, %s342
      %p346 = scmp.eq.s32.totalorder %s33, 0
      %p347 = por %p345, %p346
      %p348 = scmp.ne.s32.totalorder %s340, %s342
      %p349 = scmp.eq.s32.totalorder %s38, 1
      %p350 = por %p348, %p349
      %p351 = scmp.ne.s32.totalorder %s342, %s343
      %p352 = scmp.eq.s32.totalorder %s38, 0
      %p353 = por %p351, %p352
      %p354 = scmp.ne.s32.totalorder %s342, %s343
      %p355 = scmp.eq.s32.totalorder %s39, 1
      %p356 = por %p354, %p355
      %p358 = scmp.ne.s32.totalorder %s343, %s357
      %p359 = scmp.eq.s32.totalorder %s39, 0
      %p360 = por %p358, %p359
      %s362 = sadd.s32 %s361, 1
      %p365 = scmp.eq.s32.totalorder %s33, 1
      %p366 = scmp.ne.s32.totalorder %s361, %s363
      %p367 = scmp.eq.s32.totalorder %s33, 0
      %p368 = por %p366, %p367
      %p369 = scmp.ne.s32.totalorder %s361, %s363
      %p370 = scmp.eq.s32.totalorder %s38, 1
      %p371 = por %p369, %p370
      %p372 = scmp.ne.s32.totalorder %s363, %s364
      %p373 = scmp.eq.s32.totalorder %s38, 0
      %p374 = por %p372, %p373
      %p375 = scmp.ne.s32.totalorder %s363, %s364
      %p376 = scmp.eq.s32.totalorder %s39, 1
      %p377 = por %p375, %p376
      %p379 = scmp.ne.s32.totalorder %s364, %s378
      %p380 = scmp.eq.s32.totalorder %s39, 0
      %p381 = por %p379, %p380
      %s383 = sadd.s32 %s382, 1
      %p386 = scmp.eq.s32.totalorder %s33, 1
      %p387 = scmp.ne.s32.totalorder %s382, %s384
      %p388 = scmp.eq.s32.totalorder %s33, 0
      %p389 = por %p387, %p388
      %p390 = scmp.ne.s32.totalorder %s382, %s384
      %p391 = scmp.eq.s32.totalorder %s38, 1
      %p392 = por %p390, %p391
      %p393 = scmp.ne.s32.totalorder %s384, %s385
      %p394 = scmp.eq.s32.totalorder %s38, 0
      %p395 = por %p393, %p394
      %p396 = scmp.ne.s32.totalorder %s384, %s385
      %p397 = scmp.eq.s32.totalorder %s39, 1
      %p398 = por %p396, %p397
      %p400 = scmp.ne.s32.totalorder %s385, %s399
      %p401 = scmp.eq.s32.totalorder %s39, 0
      %p402 = por %p400, %p401
      %s404 = sadd.s32 %s403, 1
      %p407 = scmp.eq.s32.totalorder %s33, 1
      %p408 = scmp.ne.s32.totalorder %s403, %s405
      %p409 = scmp.eq.s32.totalorder %s33, 0
      %p410 = por %p408, %p409
      %p411 = scmp.ne.s32.totalorder %s403, %s405
      %p412 = scmp.eq.s32.totalorder %s38, 1
      %p413 = por %p411, %p412
      %p414 = scmp.ne.s32.totalorder %s405, %s406
      %p415 = scmp.eq.s32.totalorder %s38, 0
      %p416 = por %p414, %p415
      %p417 = scmp.ne.s32.totalorder %s405, %s406
      %p418 = scmp.eq.s32.totalorder %s39, 1
      %p419 = por %p417, %p418
      %p421 = scmp.ne.s32.totalorder %s406, %s420
      %p422 = scmp.eq.s32.totalorder %s39, 0
      %p423 = por %p421, %p422
      %s425 = sadd.s32 %s424, 1
      %p428 = scmp.eq.s32.totalorder %s33, 1
      %p429 = scmp.ne.s32.totalorder %s424, %s426
      %p430 = scmp.eq.s32.totalorder %s33, 0
      %p431 = por %p429, %p430
      %p432 = scmp.ne.s32.totalorder %s424, %s426
      %p433 = scmp.eq.s32.totalorder %s38, 1
      %p434 = por %p432, %p433
      %p435 = scmp.ne.s32.totalorder %s426, %s427
      %p436 = scmp.eq.s32.totalorder %s38, 0
      %p437 = por %p435, %p436
      %p438 = scmp.ne.s32.totalorder %s426, %s427
      %p439 = scmp.eq.s32.totalorder %s39, 1
      %p440 = por %p438, %p439
      %p442 = scmp.ne.s32.totalorder %s427, %s441
      %p443 = scmp.eq.s32.totalorder %s39, 0
      %p444 = por %p442, %p443
      %s445 = ssub.s32 %s33, %s40
      %p446 = scmp.eq.s32.totalorder %s445, 0
      %s448 = sadd.s32 %s447, 1
      %s449 = scalar_select %p446, %s447, %s448
      %p452 = pneg %p446
      %p453 = scmp.eq.s32.totalorder %s33, 1
      %p454 = por %p452, %p453
      %p455 = scmp.ne.s32.totalorder %s447, %s450
      %p456 = scmp.eq.s32.totalorder %s33, 0
      %p457 = por %p455, %p456
      %p458 = scmp.ne.s32.totalorder %s447, %s450
      %p459 = scmp.eq.s32.totalorder %s38, 1
      %p460 = por %p458, %p459
      %p461 = scmp.ne.s32.totalorder %s450, %s451
      %p462 = scmp.eq.s32.totalorder %s38, 0
      %p463 = por %p461, %p462
      %p464 = scmp.ne.s32.totalorder %s450, %s451
      %p465 = scmp.eq.s32.totalorder %s39, 1
      %p466 = por %p464, %p465
      %p468 = scmp.ne.s32.totalorder %s451, %s467
      %p469 = scmp.eq.s32.totalorder %s39, 0
      %p470 = por %p468, %p469
      %p471 = scmp.le.s32.totalorder 1, %s33
      %p472 = scmp.lt.s32.totalorder %s33, 3
      %p473 = pnand %p471, %p472
      %p474 = pneg %p473
      // Predicated region
      $region9: #{discriminator_forward.1} parent=5 // pred_check
        _
      $region10: #{discriminator_forward.1} parent=5 // pred_check_branch
        %476 = sbr.rel (%p473) target = $region12
      $region11: #{discriminator_forward.1} parent=5 // pred_region
        %s477 = ssub.s32 %s33, 1
        // Predicated region
        $region13: #{discriminator_forward.1} parent=11 // pred_check
          %p478 = pneg %p80
        $region14: #{discriminator_forward.1} parent=11 // pred_check_branch
          %480 = sbr.rel (%p478) target = $region16
        $region15: #{discriminator_forward.1} parent=11 // pred_region
          %s482 = ssub.s32 128, 128
          %483 = vsyncadd [#allocation8], %s482
          %s484 = sshll.u32 [#allocation7], 4
          %s485 = int_to_ptr.vmem [resolvable:$true] %s484
          %490 = dma.hbm_to_vmem [thread:$0]  %s1, 128, %s485, [#allocation8], 64, 64, 4
        $region16: #{discriminator_forward.1} parent=11 // pred_fallthru
          _
        // Predicated region
        $region17: #{discriminator_forward.1} parent=11 // pred_check
          %p491 = pneg %p101
        $region18: #{discriminator_forward.1} parent=11 // pred_check_branch
          %493 = sbr.rel (%p491) target = $region20
        $region19: #{discriminator_forward.1} parent=11 // pred_region
          %s495 = ssub.s32 128, 128
          %496 = vsyncadd [#allocation10], %s495
          %s497 = sshll.u32 [#allocation9], 4
          %s498 = int_to_ptr.vmem [resolvable:$true] %s497
          %503 = dma.hbm_to_vmem [thread:$0]  %s2, 128, %s498, [#allocation10], 64, 64, 4
        $region20: #{discriminator_forward.1} parent=11 // pred_fallthru
          _
        // Predicated region
        $region21: #{discriminator_forward.1} parent=11 // pred_check
          %p504 = pneg %p122
        $region22: #{discriminator_forward.1} parent=11 // pred_check_branch
          %506 = sbr.rel (%p504) target = $region24
        $region23: #{discriminator_forward.1} parent=11 // pred_region
          %s508 = ssub.s32 128, 128
          %509 = vsyncadd [#allocation10], %s508
          %s510 = sshll.u32 [#allocation11], 4
          %s511 = int_to_ptr.vmem [resolvable:$true] %s510
          %516 = dma.hbm_to_vmem [thread:$0]  %s3, 128, %s511, [#allocation10], 64, 64, 4
        $region24: #{discriminator_forward.1} parent=11 // pred_fallthru
          _
        // Predicated region
        $region25: #{discriminator_forward.1} parent=11 // pred_check
          %p517 = pneg %p143
        $region26: #{discriminator_forward.1} parent=11 // pred_check_branch
          %519 = sbr.rel (%p517) target = $region28
        $region27: #{discriminator_forward.1} parent=11 // pred_region
          _
        $region28: #{discriminator_forward.1} parent=11 // pred_fallthru
          _
        // Predicated region
        $region29: #{discriminator_forward.1} parent=11 // pred_check
          %p520 = pneg %p164
        $region30: #{discriminator_forward.1} parent=11 // pred_check_branch
          %522 = sbr.rel (%p520) target = $region32
        $region31: #{discriminator_forward.1} parent=11 // pred_region
          _
        $region32: #{discriminator_forward.1} parent=11 // pred_fallthru
          _
        // Predicated region
        $region33: #{discriminator_forward.1} parent=11 // pred_check
          %p523 = pneg %p185
        $region34: #{discriminator_forward.1} parent=11 // pred_check_branch
          %525 = sbr.rel (%p523) target = $region36
        $region35: #{discriminator_forward.1} parent=11 // pred_region
          _
        $region36: #{discriminator_forward.1} parent=11 // pred_fallthru
          _
        // Predicated region
        $region37: #{discriminator_forward.1} parent=11 // pred_check
          %p526 = pneg %p206
        $region38: #{discriminator_forward.1} parent=11 // pred_check_branch
          %528 = sbr.rel (%p526) target = $region40
        $region39: #{discriminator_forward.1} parent=11 // pred_region
          _
        $region40: #{discriminator_forward.1} parent=11 // pred_fallthru
          _
        // Predicated region
        $region41: #{discriminator_forward.1} parent=11 // pred_check
          %p529 = pneg %p227
        $region42: #{discriminator_forward.1} parent=11 // pred_check_branch
          %531 = sbr.rel (%p529) target = $region44
        $region43: #{discriminator_forward.1} parent=11 // pred_region
          %s533 = ssub.s32 16, 16
          %534 = vsyncadd [#allocation13], %s533
          %s536 = sshll.u32 [#allocation12], 4
          %s537 = int_to_ptr.vmem [resolvable:$true] %s536
          %539 = dma.hbm_to_vmem [thread:$0]  %s8, 16, %s537, [#allocation13]
        $region44: #{discriminator_forward.1} parent=11 // pred_fallthru
          _
        // Predicated region
        $region45: #{discriminator_forward.1} parent=11 // pred_check
          %p540 = pneg %p248
        $region46: #{discriminator_forward.1} parent=11 // pred_check_branch
          %542 = sbr.rel (%p540) target = $region48
        $region47: #{discriminator_forward.1} parent=11 // pred_region
          %s544 = ssub.s32 512, 512
          %545 = vsyncadd [#allocation13], %s544
          %s546 = sshll.u32 [#allocation14], 4
          %s547 = int_to_ptr.vmem [resolvable:$true] %s546
          %552 = dma.hbm_to_vmem [thread:$0]  %s9, 512, %s547, [#allocation13], 64, 64, 4
        $region48: #{discriminator_forward.1} parent=11 // pred_fallthru
          _
        // Predicated region
        $region49: #{discriminator_forward.1} parent=11 // pred_check
          %p553 = pneg %p269
        $region50: #{discriminator_forward.1} parent=11 // pred_check_branch
          %555 = sbr.rel (%p553) target = $region52
        $region51: #{discriminator_forward.1} parent=11 // pred_region
          %s557 = ssub.s32 512, 512
          %558 = vsyncadd [#allocation16], %s557
          %s559 = sshll.u32 [#allocation15], 4
          %s560 = int_to_ptr.vmem [resolvable:$true] %s559
          %565 = dma.hbm_to_vmem [thread:$0]  %s10, 512, %s560, [#allocation16], 64, 64, 4
        $region52: #{discriminator_forward.1} parent=11 // pred_fallthru
          _
        // Predicated region
        $region53: #{discriminator_forward.1} parent=11 // pred_check
          %p566 = pneg %p290
        $region54: #{discriminator_forward.1} parent=11 // pred_check_branch
          %568 = sbr.rel (%p566) target = $region56
        $region55: #{discriminator_forward.1} parent=11 // pred_region
          %s570 = ssub.s32 512, 512
          %571 = vsyncadd [#allocation16], %s570
          %s572 = sshll.u32 [#allocation17], 4
          %s573 = int_to_ptr.vmem [resolvable:$true] %s572
          %578 = dma.hbm_to_vmem [thread:$0]  %s11, 512, %s573, [#allocation16], 64, 64, 4
        $region56: #{discriminator_forward.1} parent=11 // pred_fallthru
          _
        // Predicated region
        $region57: #{discriminator_forward.1} parent=11 // pred_check
          %p579 = pneg %p311
        $region58: #{discriminator_forward.1} parent=11 // pred_check_branch
          %581 = sbr.rel (%p579) target = $region60
        $region59: #{discriminator_forward.1} parent=11 // pred_region
          %s583 = ssub.s32 16, 16
          %584 = vsyncadd [#allocation19], %s583
          %s586 = sshll.u32 [#allocation18], 4
          %s587 = int_to_ptr.vmem [resolvable:$true] %s586
          %589 = dma.hbm_to_vmem [thread:$0]  %s12, 16, %s587, [#allocation19]
        $region60: #{discriminator_forward.1} parent=11 // pred_fallthru
          _
        // Predicated region
        $region61: #{discriminator_forward.1} parent=11 // pred_check
          %p590 = pneg %p332
        $region62: #{discriminator_forward.1} parent=11 // pred_check_branch
          %592 = sbr.rel (%p590) target = $region64
        $region63: #{discriminator_forward.1} parent=11 // pred_region
          _
        $region64: #{discriminator_forward.1} parent=11 // pred_fallthru
          _
        // Predicated region
        $region65: #{discriminator_forward.1} parent=11 // pred_check
          %p593 = pneg %p353
        $region66: #{discriminator_forward.1} parent=11 // pred_check_branch
          %595 = sbr.rel (%p593) target = $region68
        $region67: #{discriminator_forward.1} parent=11 // pred_region
          %s597 = ssub.s32 512, 512
          %598 = vsyncadd [#allocation19], %s597
          %s599 = sshll.u32 [#allocation20], 4
          %s600 = int_to_ptr.vmem [resolvable:$true] %s599
          %605 = dma.hbm_to_vmem [thread:$0]  %s14, 512, %s600, [#allocation19], 64, 64, 4
        $region68: #{discriminator_forward.1} parent=11 // pred_fallthru
          _
        // Predicated region
        $region69: #{discriminator_forward.1} parent=11 // pred_check
          %p606 = pneg %p374
        $region70: #{discriminator_forward.1} parent=11 // pred_check_branch
          %608 = sbr.rel (%p606) target = $region72
        $region71: #{discriminator_forward.1} parent=11 // pred_region
          %s610 = ssub.s32 512, 512
          %611 = vsyncadd [#allocation22], %s610
          %s612 = sshll.u32 [#allocation21], 4
          %s613 = int_to_ptr.vmem [resolvable:$true] %s612
          %618 = dma.hbm_to_vmem [thread:$0]  %s15, 512, %s613, [#allocation22], 64, 64, 4
        $region72: #{discriminator_forward.1} parent=11 // pred_fallthru
          _
        // Predicated region
        $region73: #{discriminator_forward.1} parent=11 // pred_check
          %p619 = pneg %p395
        $region74: #{discriminator_forward.1} parent=11 // pred_check_branch
          %621 = sbr.rel (%p619) target = $region76
        $region75: #{discriminator_forward.1} parent=11 // pred_region
          _
        $region76: #{discriminator_forward.1} parent=11 // pred_fallthru
          _
        // Predicated region
        $region77: #{discriminator_forward.1} parent=11 // pred_check
          %p622 = pneg %p416
        $region78: #{discriminator_forward.1} parent=11 // pred_check_branch
          %624 = sbr.rel (%p622) target = $region80
        $region79: #{discriminator_forward.1} parent=11 // pred_region
          _
        $region80: #{discriminator_forward.1} parent=11 // pred_fallthru
          _
        // Predicated region
        $region81: #{discriminator_forward.1} parent=11 // pred_check
          %p625 = pneg %p437
        $region82: #{discriminator_forward.1} parent=11 // pred_check_branch
          %627 = sbr.rel (%p625) target = $region84
        $region83: #{discriminator_forward.1} parent=11 // pred_region
          _
        $region84: #{discriminator_forward.1} parent=11 // pred_fallthru
          _
      $region12: #{discriminator_forward.1} parent=5 // pred_fallthru
        _
      %p628 = scmp.lt.s32.totalorder %s33, 2
      // Predicated region
      $region85: #{discriminator_forward.1} parent=5 // pred_check
        %p629 = pneg %p628
      $region86: #{discriminator_forward.1} parent=5 // pred_check_branch
        %631 = sbr.rel (%p629) target = $region88
      $region87: #{discriminator_forward.1} parent=5 // pred_region
        // Predicated region
        $region89: #{discriminator_forward.1} parent=87 // pred_check
          %p632 = pneg %p53
        $region90: #{discriminator_forward.1} parent=87 // pred_check_branch
          %634 = sbr.rel (%p632) target = $region92
        $region91: #{discriminator_forward.1} parent=87 // pred_region
          %p635 = scmp.lt.s32.totalorder %s33, 1
          %s636 = scalar_select %p635, %s33, 1
          %s637 = smul.addr %s636, 8
          %s638 = scalar_lea.vmem %s0, %s637
        $region92: #{discriminator_forward.1} parent=87 // pred_fallthru
          _
      $region88: #{discriminator_forward.1} parent=5 // pred_fallthru
        _
      %p639 = scmp.le.s32.totalorder 1, %s33
      %p640 = scmp.lt.s32.totalorder %s33, 3
      %p641 = pnand %p639, %p640
      %p642 = pneg %p641
      // Predicated region
      $region93: #{discriminator_forward.1} parent=5 // pred_check
        _
      $region94: #{discriminator_forward.1} parent=5 // pred_check_branch
        %644 = sbr.rel (%p641) target = $region96
      $region95: #{discriminator_forward.1} parent=5 // pred_region
        %s645 = ssub.s32 %s33, 1
        // Predicated region
        $region97: #{discriminator_forward.1} parent=95 // pred_check
          %p646 = pneg %p80
        $region98: #{discriminator_forward.1} parent=95 // pred_check_branch
          %648 = sbr.rel (%p646) target = $region100
        $region99: #{discriminator_forward.1} parent=95 // pred_region
          %649 = dma.done [#allocation8], 128
        $region100: #{discriminator_forward.1} parent=95 // pred_fallthru
          _
        // Predicated region
        $region101: #{discriminator_forward.1} parent=95 // pred_check
          %p650 = pneg %p101
        $region102: #{discriminator_forward.1} parent=95 // pred_check_branch
          %652 = sbr.rel (%p650) target = $region104
        $region103: #{discriminator_forward.1} parent=95 // pred_region
          %653 = dma.done [#allocation10], 128
        $region104: #{discriminator_forward.1} parent=95 // pred_fallthru
          _
        // Predicated region
        $region105: #{discriminator_forward.1} parent=95 // pred_check
          %p654 = pneg %p122
        $region106: #{discriminator_forward.1} parent=95 // pred_check_branch
          %656 = sbr.rel (%p654) target = $region108
        $region107: #{discriminator_forward.1} parent=95 // pred_region
          %657 = dma.done [#allocation10], 128
        $region108: #{discriminator_forward.1} parent=95 // pred_fallthru
          _
        // Predicated region
        $region109: #{discriminator_forward.1} parent=95 // pred_check
          %p658 = pneg %p227
        $region110: #{discriminator_forward.1} parent=95 // pred_check_branch
          %660 = sbr.rel (%p658) target = $region112
        $region111: #{discriminator_forward.1} parent=95 // pred_region
          %661 = dma.done [#allocation13], 16
        $region112: #{discriminator_forward.1} parent=95 // pred_fallthru
          _
        // Predicated region
        $region113: #{discriminator_forward.1} parent=95 // pred_check
          %p662 = pneg %p248
        $region114: #{discriminator_forward.1} parent=95 // pred_check_branch
          %664 = sbr.rel (%p662) target = $region116
        $region115: #{discriminator_forward.1} parent=95 // pred_region
          %665 = dma.done [#allocation13], 512
        $region116: #{discriminator_forward.1} parent=95 // pred_fallthru
          _
        // Predicated region
        $region117: #{discriminator_forward.1} parent=95 // pred_check
          %p666 = pneg %p269
        $region118: #{discriminator_forward.1} parent=95 // pred_check_branch
          %668 = sbr.rel (%p666) target = $region120
        $region119: #{discriminator_forward.1} parent=95 // pred_region
          %669 = dma.done [#allocation16], 512
        $region120: #{discriminator_forward.1} parent=95 // pred_fallthru
          _
        // Predicated region
        $region121: #{discriminator_forward.1} parent=95 // pred_check
          %p670 = pneg %p290
        $region122: #{discriminator_forward.1} parent=95 // pred_check_branch
          %672 = sbr.rel (%p670) target = $region124
        $region123: #{discriminator_forward.1} parent=95 // pred_region
          %673 = dma.done [#allocation16], 512
        $region124: #{discriminator_forward.1} parent=95 // pred_fallthru
          _
        // Predicated region
        $region125: #{discriminator_forward.1} parent=95 // pred_check
          %p674 = pneg %p311
        $region126: #{discriminator_forward.1} parent=95 // pred_check_branch
          %676 = sbr.rel (%p674) target = $region128
        $region127: #{discriminator_forward.1} parent=95 // pred_region
          %677 = dma.done [#allocation19], 16
        $region128: #{discriminator_forward.1} parent=95 // pred_fallthru
          _
        // Predicated region
        $region129: #{discriminator_forward.1} parent=95 // pred_check
          %p678 = pneg %p353
        $region130: #{discriminator_forward.1} parent=95 // pred_check_branch
          %680 = sbr.rel (%p678) target = $region132
        $region131: #{discriminator_forward.1} parent=95 // pred_region
          %681 = dma.done [#allocation19], 512
        $region132: #{discriminator_forward.1} parent=95 // pred_fallthru
          _
        // Predicated region
        $region133: #{discriminator_forward.1} parent=95 // pred_check
          %p682 = pneg %p374
        $region134: #{discriminator_forward.1} parent=95 // pred_check_branch
          %684 = sbr.rel (%p682) target = $region136
        $region135: #{discriminator_forward.1} parent=95 // pred_region
          %685 = dma.done [#allocation22], 512
        $region136: #{discriminator_forward.1} parent=95 // pred_fallthru
          _
        %p686 = scmp.lt.s32.totalorder %s38, 1
        %s687 = scalar_select %p686, %s38, 1
        %s688 = smul.addr %s687, 8
        %s689 = scalar_lea.vmem %s0, %s688
        %p690 = pneg %p59
        %p691 = pneg %p56
        %p692 = pneg %p80
        %p693 = pneg %p77
        %p694 = pneg %p101
        %p695 = pneg %p98
        %p696 = pneg %p122
        %p697 = pneg %p119
        %p698 = pneg %p143
        %p699 = pneg %p140
        %p700 = pneg %p164
        %p701 = pneg %p161
        %p702 = pneg %p185
        %p703 = pneg %p182
        %p704 = pneg %p206
        %p705 = pneg %p203
        %p706 = pneg %p227
        %p707 = pneg %p224
        %p708 = pneg %p248
        %p709 = pneg %p245
        %p710 = pneg %p269
        %p711 = pneg %p266
        %p712 = pneg %p290
        %p713 = pneg %p287
        %p714 = pneg %p311
        %p715 = pneg %p308
        %p716 = pneg %p332
        %p717 = pneg %p329
        %p718 = pneg %p353
        %p719 = pneg %p350
        %p720 = pneg %p374
        %p721 = pneg %p371
        %p722 = pneg %p395
        %p723 = pneg %p392
        %p724 = pneg %p416
        %p725 = pneg %p413
        %p726 = pneg %p437
        %p727 = pneg %p434
        %p728 = pneg %p463
        %p729 = pneg %p460
        %p730 = scmp.lt.s32.totalorder %s38, 1
        %s731 = scalar_select %p730, %s38, 1
        %s732 = smul.addr %s731, 4
        %s733 = scalar_lea.vmem %s19, %s732
        %p734 = scmp.lt.s32.totalorder %s38, 1
        %s735 = scalar_select %p734, %s38, 1
        %s736 = smul.addr %s735, 8
        %s737 = scalar_lea.vmem %s0, %s736
        %p738 = scmp.lt.s32.totalorder %s38, 1
        %s739 = scalar_select %p738, %s38, 1
        %s740 = smul.addr %s739, 4
        %s741 = scalar_lea.vmem %s19, %s740
        %vm743 = vcmask 521216
        %744 = vst.msk [vmem:[#allocation2] sm:$0x3f] %vm743, 0.0
        %745 = vst.msk [vmem:[#allocation3] sm:$0x3f] %vm743, 0.0
        %746 = vst.msk [vmem:[#allocation4] sm:$0x3f] %vm743, 0.0
        %747 = vst.msk [vmem:[#allocation5] sm:$0x3f] %vm743, 0.0
        %v748 = vld [vmem:[%s737] sm:$0x3f]
        %v749 = vld [vmem:[#allocation7] sm:$0xf]
        %v750 = vld [vmem:[#allocation7 + $0x4] sm:$0xf]
        %v751 = vld [vmem:[#allocation9] sm:$0xf]
        %v752 = vld [vmem:[#allocation9 + $0x4] sm:$0xf]
        %v753 = vld [vmem:[#allocation11] sm:$0xf]
        %v754 = vld [vmem:[#allocation11 + $0x4] sm:$0xf]
        %v755 = vld [vmem:[%s4] sm:$0x1]
        %v756 = vpack.c.bf16 %v748, %v748
        %v758 = vshrl.u32 %v756, 16
        %v760 = vshll.u32 %v756, 16
        %v762 = vrot.slane %v760, 1
        %v763 = vor.u32 %v758, %v762
        %v766 = vunpack.c.l.b16 %v751
        %v767 = vunpack.c.l.b16 %v752
        %v768 = vpack.c.b16 %v767, %v766
        %vm770 = vcmask 130048
        %v772 = vsel %vm770, %v763, 0
        %774 = vmatprep.subr.bf16.mxu0 0
        %775 = vmatpush1.bf16.msra.mxu0 %v768
        %776 = vmatprep.subr.bf16.mxu0 0
        %777 = vmatpush1.bf16.msra.mxu0 0
        %778 = vmatprep.subr.bf16.mxu0 0
        %779 = vmatpush1.bf16.msra.mxu0 0
        %780 = vmatprep.subr.bf16.mxu0 0
        %781 = vmatpush1.bf16.msra.mxu0 0
        %782 = vmatprep.subr.bf16.mxu0 0
        %783 = vmatpush1.bf16.msra.mxu0 0
        %784 = vmatprep.subr.bf16.mxu0 0
        %785 = vmatpush1.bf16.msra.mxu0 0
        %786 = vmatprep.subr.bf16.mxu0 0
        %787 = vmatpush1.bf16.msra.mxu0 0
        %788 = vmatprep.subr.bf16.mxu0 0
        %789 = vmatpush1.bf16.msra.mxu0 0
        %790 = vmatprep.subr.bf16.mxu0 0
        %791 = vmatpush1.bf16.msra.mxu0 0
        %792 = vmatprep.subr.bf16.mxu0 0
        %793 = vmatpush1.bf16.msra.mxu0 0
        %794 = vmatprep.subr.bf16.mxu0 0
        %795 = vmatpush1.bf16.msra.mxu0 0
        %796 = vmatprep.subr.bf16.mxu0 0
        %797 = vmatpush1.bf16.msra.mxu0 0
        %798 = vmatprep.subr.bf16.mxu0 0
        %799 = vmatpush1.bf16.msra.mxu0 0
        %800 = vmatprep.subr.bf16.mxu0 0
        %801 = vmatpush1.bf16.msra.mxu0 0
        %802 = vmatprep.subr.bf16.mxu0 0
        %803 = vmatpush1.bf16.msra.mxu0 0
        %804 = vmatprep.subr.bf16.mxu0 0
        %805 = vmatpush1.bf16.msra.mxu0 0
        %806 = vmatprep.mubr.bf16.mxu0 0
        %807 = vmatmul.mubr.bf16.gmra.mrb[0].mxu0 %v772
        %v808 = vpop.f32.mrb[0].mxu0
        %v809 = vadd.f32 0.0, %v808
        %v810 = vpop.f32.mrb[0].mxu0
        %v811 = vpop.f32.mrb[0].mxu0
        %v812 = vpop.f32.mrb[0].mxu0
        %813 = vdwg.mxu0
        %v816 = vunpack.c.l.b16 %v749
        %v817 = vunpack.c.l.b16 %v750
        %v818 = vpack.c.b16 %v817, %v816
        %v820 = vsel %vm770, %v756, 0
        %822 = vmatprep.subr.bf16.mxu0 0
        %823 = vmatpush1.bf16.msra.mxu0 %v818
        %824 = vmatprep.subr.bf16.mxu0 0
        %825 = vmatpush1.bf16.msra.mxu0 0
        %826 = vmatprep.subr.bf16.mxu0 0
        %827 = vmatpush1.bf16.msra.mxu0 0
        %828 = vmatprep.subr.bf16.mxu0 0
        %829 = vmatpush1.bf16.msra.mxu0 0
        %830 = vmatprep.subr.bf16.mxu0 0
        %831 = vmatpush1.bf16.msra.mxu0 0
        %832 = vmatprep.subr.bf16.mxu0 0
        %833 = vmatpush1.bf16.msra.mxu0 0
        %834 = vmatprep.subr.bf16.mxu0 0
        %835 = vmatpush1.bf16.msra.mxu0 0
        %836 = vmatprep.subr.bf16.mxu0 0
        %837 = vmatpush1.bf16.msra.mxu0 0
        %838 = vmatprep.subr.bf16.mxu0 0
        %839 = vmatpush1.bf16.msra.mxu0 0
        %840 = vmatprep.subr.bf16.mxu0 0
        %841 = vmatpush1.bf16.msra.mxu0 0
        %842 = vmatprep.subr.bf16.mxu0 0
        %843 = vmatpush1.bf16.msra.mxu0 0
        %844 = vmatprep.subr.bf16.mxu0 0
        %845 = vmatpush1.bf16.msra.mxu0 0
        %846 = vmatprep.subr.bf16.mxu0 0
        %847 = vmatpush1.bf16.msra.mxu0 0
        %848 = vmatprep.subr.bf16.mxu0 0
        %849 = vmatpush1.bf16.msra.mxu0 0
        %850 = vmatprep.subr.bf16.mxu0 0
        %851 = vmatpush1.bf16.msra.mxu0 0
        %852 = vmatprep.subr.bf16.mxu0 0
        %853 = vmatpush1.bf16.msra.mxu0 0
        %854 = vmatprep.mubr.bf16.mxu0 0
        %855 = vmatmul.mubr.bf16.gmra.mrb[0].mxu0 %v820
        %v856 = vpop.f32.mrb[0].mxu0
        %v857 = vadd.f32 %v809, %v856
        %v858 = vpop.f32.mrb[0].mxu0
        %v859 = vpop.f32.mrb[0].mxu0
        %v860 = vpop.f32.mrb[0].mxu0
        %861 = vdwg.mxu0
        %v863 = vrot.slane %v756, 1
        %v866 = vunpack.c.l.b16 %v753
        %v867 = vunpack.c.l.b16 %v754
        %v868 = vpack.c.b16 %v867, %v866
        %v871 = vsel %vm770, %v863, 0
        %873 = vmatprep.subr.bf16.mxu0 0
        %874 = vmatpush1.bf16.msra.mxu0 %v868
        %875 = vmatprep.subr.bf16.mxu0 0
        %876 = vmatpush1.bf16.msra.mxu0 0
        %877 = vmatprep.subr.bf16.mxu0 0
        %878 = vmatpush1.bf16.msra.mxu0 0
        %879 = vmatprep.subr.bf16.mxu0 0
        %880 = vmatpush1.bf16.msra.mxu0 0
        %881 = vmatprep.subr.bf16.mxu0 0
        %882 = vmatpush1.bf16.msra.mxu0 0
        %883 = vmatprep.subr.bf16.mxu0 0
        %884 = vmatpush1.bf16.msra.mxu0 0
        %885 = vmatprep.subr.bf16.mxu0 0
        %886 = vmatpush1.bf16.msra.mxu0 0
        %887 = vmatprep.subr.bf16.mxu0 0
        %888 = vmatpush1.bf16.msra.mxu0 0
        %889 = vmatprep.subr.bf16.mxu0 0
        %890 = vmatpush1.bf16.msra.mxu0 0
        %891 = vmatprep.subr.bf16.mxu0 0
        %892 = vmatpush1.bf16.msra.mxu0 0
        %893 = vmatprep.subr.bf16.mxu0 0
        %894 = vmatpush1.bf16.msra.mxu0 0
        %895 = vmatprep.subr.bf16.mxu0 0
        %896 = vmatpush1.bf16.msra.mxu0 0
        %897 = vmatprep.subr.bf16.mxu0 0
        %898 = vmatpush1.bf16.msra.mxu0 0
        %899 = vmatprep.subr.bf16.mxu0 0
        %900 = vmatpush1.bf16.msra.mxu0 0
        %901 = vmatprep.subr.bf16.mxu0 0
        %902 = vmatpush1.bf16.msra.mxu0 0
        %903 = vmatprep.subr.bf16.mxu0 0
        %904 = vmatpush1.bf16.msra.mxu0 0
        %905 = vmatprep.mubr.bf16.mxu0 0
        %906 = vmatmul.mubr.bf16.gmra.mrb[0].mxu0 %v871
        %v907 = vpop.f32.mrb[0].mxu0
        %v908 = vadd.f32 0.0, %v907
        %v909 = vpop.f32.mrb[0].mxu0
        %v910 = vpop.f32.mrb[0].mxu0
        %v911 = vpop.f32.mrb[0].mxu0
        %912 = vdwg.mxu0
        %v913 = vadd.f32 %v857, %v908
        %v915 = vlaneseq
        %v916 = vshrl.u32 %v915, 7
        %v917 = vsub.s32 0, %v916
        %v918 = vrot.slane %v755, %v917
        %v920 = vadd.f32 %v913, %v918
        %vm921 = vcmp.ge.f32.partialorder %v920, 0.0
        %v922 = vmul.f32 %v920, 0.2
        %v923 = vsel %vm921, %v920, %v922
        %vm924 = vcmask 519168
        %925 = vst.msk [vmem:[#allocation2 + $0x1] sm:$0xf] %vm924, %v923
        %v926 = vld [vmem:[#allocation2] sm:$0x3f]
        %v927 = vld [vmem:[%s5] sm:$0xf]
        %v928 = vld [vmem:[%s5 + $0x4] sm:$0xf]
        %v929 = vld [vmem:[%s5 + $0x8] sm:$0xf]
        %v930 = vld [vmem:[%s5 + $0xc] sm:$0xf]
        %v931 = vld [vmem:[%s5 + $0x10] sm:$0xf]
        %v932 = vld [vmem:[%s5 + $0x14] sm:$0xf]
        %v933 = vld [vmem:[%s5 + $0x18] sm:$0xf]
        %v934 = vld [vmem:[%s5 + $0x1c] sm:$0xf]
        %v935 = vld [vmem:[%s6] sm:$0xf]
        %v936 = vld [vmem:[%s6 + $0x4] sm:$0xf]
        %v937 = vld [vmem:[%s6 + $0x8] sm:$0xf]
        %v938 = vld [vmem:[%s6 + $0xc] sm:$0xf]
        %v939 = vld [vmem:[%s6 + $0x10] sm:$0xf]
        %v940 = vld [vmem:[%s6 + $0x14] sm:$0xf]
        %v941 = vld [vmem:[%s6 + $0x18] sm:$0xf]
        %v942 = vld [vmem:[%s6 + $0x1c] sm:$0xf]
        %v943 = vld [vmem:[%s7] sm:$0xf]
        %v944 = vld [vmem:[%s7 + $0x4] sm:$0xf]
        %v945 = vld [vmem:[%s7 + $0x8] sm:$0xf]
        %v946 = vld [vmem:[%s7 + $0xc] sm:$0xf]
        %v947 = vld [vmem:[%s7 + $0x10] sm:$0xf]
        %v948 = vld [vmem:[%s7 + $0x14] sm:$0xf]
        %v949 = vld [vmem:[%s7 + $0x18] sm:$0xf]
        %v950 = vld [vmem:[%s7 + $0x1c] sm:$0xf]
        %v951 = vld [vmem:[#allocation12] sm:$0x1]
        %v952 = vpack.c.bf16 %v926, %v926
        %v954 = vshrl.u32 %v952, 16
        %v956 = vshll.u32 %v952, 16
        %v958 = vrot.slane %v956, 1
        %v959 = vor.u32 %v954, %v958
        %v968 = vunpack.c.l.b16 %v935
        %v969 = vunpack.c.l.b16 %v936
        %v970 = vunpack.c.l.b16 %v937
        %v971 = vunpack.c.l.b16 %v938
        %v972 = vunpack.c.l.b16 %v939
        %v973 = vunpack.c.l.b16 %v940
        %v974 = vunpack.c.l.b16 %v941
        %v975 = vunpack.c.l.b16 %v942
        %v976 = vpack.c.b16 %v969, %v968
        %v977 = vpack.c.b16 %v971, %v970
        %v978 = vpack.c.b16 %v973, %v972
        %v979 = vpack.c.b16 %v975, %v974
        %vm984 = vcmask 523264
        %v986 = vsel %vm984, %v959, 0
        %988 = vmatprep.subr.bf16.mxu0 0
        %989 = vmatpush1.bf16.msra.mxu0 %v976
        %990 = vmatprep.subr.bf16.mxu0 0
        %991 = vmatpush1.bf16.msra.mxu0 %v977
        %992 = vmatprep.subr.bf16.mxu0 0
        %993 = vmatpush1.bf16.msra.mxu0 %v978
        %994 = vmatprep.subr.bf16.mxu0 0
        %995 = vmatpush1.bf16.msra.mxu0 %v979
        %996 = vmatprep.subr.bf16.mxu0 0
        %997 = vmatpush1.bf16.msra.mxu0 0
        %998 = vmatprep.subr.bf16.mxu0 0
        %999 = vmatpush1.bf16.msra.mxu0 0
        %1000 = vmatprep.subr.bf16.mxu0 0
        %1001 = vmatpush1.bf16.msra.mxu0 0
        %1002 = vmatprep.subr.bf16.mxu0 0
        %1003 = vmatpush1.bf16.msra.mxu0 0
        %1004 = vmatprep.subr.bf16.mxu0 0
        %1005 = vmatpush1.bf16.msra.mxu0 0
        %1006 = vmatprep.subr.bf16.mxu0 0
        %1007 = vmatpush1.bf16.msra.mxu0 0
        %1008 = vmatprep.subr.bf16.mxu0 0
        %1009 = vmatpush1.bf16.msra.mxu0 0
        %1010 = vmatprep.subr.bf16.mxu0 0
        %1011 = vmatpush1.bf16.msra.mxu0 0
        %1012 = vmatprep.subr.bf16.mxu0 0
        %1013 = vmatpush1.bf16.msra.mxu0 0
        %1014 = vmatprep.subr.bf16.mxu0 0
        %1015 = vmatpush1.bf16.msra.mxu0 0
        %1016 = vmatprep.subr.bf16.mxu0 0
        %1017 = vmatpush1.bf16.msra.mxu0 0
        %1018 = vmatprep.subr.bf16.mxu0 0
        %1019 = vmatpush1.bf16.msra.mxu0 0
        %1020 = vmatprep.mubr.bf16.mxu0 0
        %1021 = vmatmul.mubr.bf16.gmra.mrb[0].mxu0 %v986
        %v1022 = vpop.f32.mrb[0].mxu0
        %v1023 = vadd.f32 0.0, %v1022
        %v1024 = vpop.f32.mrb[0].mxu0
        %v1025 = vpop.f32.mrb[0].mxu0
        %v1026 = vpop.f32.mrb[0].mxu0
        %1027 = vdwg.mxu0
        %v1036 = vunpack.c.l.b16 %v927
        %v1037 = vunpack.c.l.b16 %v928
        %v1038 = vunpack.c.l.b16 %v929
        %v1039 = vunpack.c.l.b16 %v930
        %v1040 = vunpack.c.l.b16 %v931
        %v1041 = vunpack.c.l.b16 %v932
        %v1042 = vunpack.c.l.b16 %v933
        %v1043 = vunpack.c.l.b16 %v934
        %v1044 = vpack.c.b16 %v1037, %v1036
        %v1045 = vpack.c.b16 %v1039, %v1038
        %v1046 = vpack.c.b16 %v1041, %v1040
        %v1047 = vpack.c.b16 %v1043, %v1042
        %v1052 = vsel %vm984, %v952, 0
        %1054 = vmatprep.subr.bf16.mxu0 0
        %1055 = vmatpush1.bf16.msra.mxu0 %v1044
        %1056 = vmatprep.subr.bf16.mxu0 0
        %1057 = vmatpush1.bf16.msra.mxu0 %v1045
        %1058 = vmatprep.subr.bf16.mxu0 0
        %1059 = vmatpush1.bf16.msra.mxu0 %v1046
        %1060 = vmatprep.subr.bf16.mxu0 0
        %1061 = vmatpush1.bf16.msra.mxu0 %v1047
        %1062 = vmatprep.subr.bf16.mxu0 0
        %1063 = vmatpush1.bf16.msra.mxu0 0
        %1064 = vmatprep.subr.bf16.mxu0 0
        %1065 = vmatpush1.bf16.msra.mxu0 0
        %1066 = vmatprep.subr.bf16.mxu0 0
        %1067 = vmatpush1.bf16.msra.mxu0 0
        %1068 = vmatprep.subr.bf16.mxu0 0
        %1069 = vmatpush1.bf16.msra.mxu0 0
        %1070 = vmatprep.subr.bf16.mxu0 0
        %1071 = vmatpush1.bf16.msra.mxu0 0
        %1072 = vmatprep.subr.bf16.mxu0 0
        %1073 = vmatpush1.bf16.msra.mxu0 0
        %1074 = vmatprep.subr.bf16.mxu0 0
        %1075 = vmatpush1.bf16.msra.mxu0 0
        %1076 = vmatprep.subr.bf16.mxu0 0
        %1077 = vmatpush1.bf16.msra.mxu0 0
        %1078 = vmatprep.subr.bf16.mxu0 0
        %1079 = vmatpush1.bf16.msra.mxu0 0
        %1080 = vmatprep.subr.bf16.mxu0 0
        %1081 = vmatpush1.bf16.msra.mxu0 0
        %1082 = vmatprep.subr.bf16.mxu0 0
        %1083 = vmatpush1.bf16.msra.mxu0 0
        %1084 = vmatprep.subr.bf16.mxu0 0
        %1085 = vmatpush1.bf16.msra.mxu0 0
        %1086 = vmatprep.mubr.bf16.mxu0 0
        %1087 = vmatmul.mubr.bf16.gmra.mrb[0].mxu0 %v1052
        %v1088 = vpop.f32.mrb[0].mxu0
        %v1089 = vadd.f32 %v1023, %v1088
        %v1090 = vpop.f32.mrb[0].mxu0
        %v1091 = vpop.f32.mrb[0].mxu0
        %v1092 = vpop.f32.mrb[0].mxu0
        %1093 = vdwg.mxu0
        %v1095 = vrot.slane %v952, 1
        %v1104 = vunpack.c.l.b16 %v943
        %v1105 = vunpack.c.l.b16 %v944
        %v1106 = vunpack.c.l.b16 %v945
        %v1107 = vunpack.c.l.b16 %v946
        %v1108 = vunpack.c.l.b16 %v947
        %v1109 = vunpack.c.l.b16 %v948
        %v1110 = vunpack.c.l.b16 %v949
        %v1111 = vunpack.c.l.b16 %v950
        %v1112 = vpack.c.b16 %v1105, %v1104
        %v1113 = vpack.c.b16 %v1107, %v1106
        %v1114 = vpack.c.b16 %v1109, %v1108
        %v1115 = vpack.c.b16 %v1111, %v1110
        %v1121 = vsel %vm984, %v1095, 0
        %1123 = vmatprep.subr.bf16.mxu0 0
        %1124 = vmatpush1.bf16.msra.mxu0 %v1112
        %1125 = vmatprep.subr.bf16.mxu0 0
        %1126 = vmatpush1.bf16.msra.mxu0 %v1113
        %1127 = vmatprep.subr.bf16.mxu0 0
        %1128 = vmatpush1.bf16.msra.mxu0 %v1114
        %1129 = vmatprep.subr.bf16.mxu0 0
        %1130 = vmatpush1.bf16.msra.mxu0 %v1115
        %1131 = vmatprep.subr.bf16.mxu0 0
        %1132 = vmatpush1.bf16.msra.mxu0 0
        %1133 = vmatprep.subr.bf16.mxu0 0
        %1134 = vmatpush1.bf16.msra.mxu0 0
        %1135 = vmatprep.subr.bf16.mxu0 0
        %1136 = vmatpush1.bf16.msra.mxu0 0
        %1137 = vmatprep.subr.bf16.mxu0 0
        %1138 = vmatpush1.bf16.msra.mxu0 0
        %1139 = vmatprep.subr.bf16.mxu0 0
        %1140 = vmatpush1.bf16.msra.mxu0 0
        %1141 = vmatprep.subr.bf16.mxu0 0
        %1142 = vmatpush1.bf16.msra.mxu0 0
        %1143 = vmatprep.subr.bf16.mxu0 0
        %1144 = vmatpush1.bf16.msra.mxu0 0
        %1145 = vmatprep.subr.bf16.mxu0 0
        %1146 = vmatpush1.bf16.msra.mxu0 0
        %1147 = vmatprep.subr.bf16.mxu0 0
        %1148 = vmatpush1.bf16.msra.mxu0 0
        %1149 = vmatprep.subr.bf16.mxu0 0
        %1150 = vmatpush1.bf16.msra.mxu0 0
        %1151 = vmatprep.subr.bf16.mxu0 0
        %1152 = vmatpush1.bf16.msra.mxu0 0
        %1153 = vmatprep.subr.bf16.mxu0 0
        %1154 = vmatpush1.bf16.msra.mxu0 0
        %1155 = vmatprep.mubr.bf16.mxu0 0
        %1156 = vmatmul.mubr.bf16.gmra.mrb[0].mxu0 %v1121
        %v1157 = vpop.f32.mrb[0].mxu0
        %v1158 = vadd.f32 0.0, %v1157
        %v1159 = vpop.f32.mrb[0].mxu0
        %v1160 = vpop.f32.mrb[0].mxu0
        %v1161 = vpop.f32.mrb[0].mxu0
        %1162 = vdwg.mxu0
        %v1163 = vadd.f32 %v1089, %v1158
        %v1165 = vlaneseq
        %v1166 = vshrl.u32 %v1165, 7
        %v1167 = vsub.s32 0, %v1166
        %v1168 = vrot.slane %v951, %v1167
        %v1170 = vadd.f32 %v1163, %v1168
        %vm1171 = vcmp.ge.f32.partialorder %v1170, 0.0
        %v1172 = vmul.f32 %v1170, 0.2
        %v1173 = vsel %vm1171, %v1170, %v1172
        %1174 = vst.msk [vmem:[#allocation3 + $0x1] sm:$0xf] %vm924, %v1173
        %v1175 = vld [vmem:[#allocation3] sm:$0x3f]
        %v1176 = vld [vmem:[#allocation14] sm:$0xf]
        %v1177 = vld [vmem:[#allocation14 + $0x4] sm:$0xf]
        %v1178 = vld [vmem:[#allocation14 + $0x8] sm:$0xf]
        %v1179 = vld [vmem:[#allocation14 + $0xc] sm:$0xf]
        %v1180 = vld [vmem:[#allocation14 + $0x10] sm:$0xf]
        %v1181 = vld [vmem:[#allocation14 + $0x14] sm:$0xf]
        %v1182 = vld [vmem:[#allocation14 + $0x18] sm:$0xf]
        %v1183 = vld [vmem:[#allocation14 + $0x1c] sm:$0xf]
        %v1184 = vld [vmem:[#allocation15] sm:$0xf]
        %v1185 = vld [vmem:[#allocation15 + $0x4] sm:$0xf]
        %v1186 = vld [vmem:[#allocation15 + $0x8] sm:$0xf]
        %v1187 = vld [vmem:[#allocation15 + $0xc] sm:$0xf]
        %v1188 = vld [vmem:[#allocation15 + $0x10] sm:$0xf]
        %v1189 = vld [vmem:[#allocation15 + $0x14] sm:$0xf]
        %v1190 = vld [vmem:[#allocation15 + $0x18] sm:$0xf]
        %v1191 = vld [vmem:[#allocation15 + $0x1c] sm:$0xf]
        %v1192 = vld [vmem:[#allocation17] sm:$0xf]
        %v1193 = vld [vmem:[#allocation17 + $0x4] sm:$0xf]
        %v1194 = vld [vmem:[#allocation17 + $0x8] sm:$0xf]
        %v1195 = vld [vmem:[#allocation17 + $0xc] sm:$0xf]
        %v1196 = vld [vmem:[#allocation17 + $0x10] sm:$0xf]
        %v1197 = vld [vmem:[#allocation17 + $0x14] sm:$0xf]
        %v1198 = vld [vmem:[#allocation17 + $0x18] sm:$0xf]
        %v1199 = vld [vmem:[#allocation17 + $0x1c] sm:$0xf]
        %v1200 = vld [vmem:[#allocation18] sm:$0x1]
        %v1201 = vpack.c.bf16 %v1175, %v1175
        %v1203 = vshrl.u32 %v1201, 16
        %v1205 = vshll.u32 %v1201, 16
        %v1207 = vrot.slane %v1205, 1
        %v1208 = vor.u32 %v1203, %v1207
        %v1217 = vunpack.c.l.b16 %v1184
        %v1218 = vunpack.c.l.b16 %v1185
        %v1219 = vunpack.c.l.b16 %v1186
        %v1220 = vunpack.c.l.b16 %v1187
        %v1221 = vunpack.c.l.b16 %v1188
        %v1222 = vunpack.c.l.b16 %v1189
        %v1223 = vunpack.c.l.b16 %v1190
        %v1224 = vunpack.c.l.b16 %v1191
        %v1225 = vpack.c.b16 %v1218, %v1217
        %v1226 = vpack.c.b16 %v1220, %v1219
        %v1227 = vpack.c.b16 %v1222, %v1221
        %v1228 = vpack.c.b16 %v1224, %v1223
        %v1234 = vsel %vm984, %v1208, 0
        %1236 = vmatprep.subr.bf16.mxu0 0
        %1237 = vmatpush1.bf16.msra.mxu0 %v1225
        %1238 = vmatprep.subr.bf16.mxu0 0
        %1239 = vmatpush1.bf16.msra.mxu0 %v1226
        %1240 = vmatprep.subr.bf16.mxu0 0
        %1241 = vmatpush1.bf16.msra.mxu0 %v1227
        %1242 = vmatprep.subr.bf16.mxu0 0
        %1243 = vmatpush1.bf16.msra.mxu0 %v1228
        %1244 = vmatprep.subr.bf16.mxu0 0
        %1245 = vmatpush1.bf16.msra.mxu0 0
        %1246 = vmatprep.subr.bf16.mxu0 0
        %1247 = vmatpush1.bf16.msra.mxu0 0
        %1248 = vmatprep.subr.bf16.mxu0 0
        %1249 = vmatpush1.bf16.msra.mxu0 0
        %1250 = vmatprep.subr.bf16.mxu0 0
        %1251 = vmatpush1.bf16.msra.mxu0 0
        %1252 = vmatprep.subr.bf16.mxu0 0
        %1253 = vmatpush1.bf16.msra.mxu0 0
        %1254 = vmatprep.subr.bf16.mxu0 0
        %1255 = vmatpush1.bf16.msra.mxu0 0
        %1256 = vmatprep.subr.bf16.mxu0 0
        %1257 = vmatpush1.bf16.msra.mxu0 0
        %1258 = vmatprep.subr.bf16.mxu0 0
        %1259 = vmatpush1.bf16.msra.mxu0 0
        %1260 = vmatprep.subr.bf16.mxu0 0
        %1261 = vmatpush1.bf16.msra.mxu0 0
        %1262 = vmatprep.subr.bf16.mxu0 0
        %1263 = vmatpush1.bf16.msra.mxu0 0
        %1264 = vmatprep.subr.bf16.mxu0 0
        %1265 = vmatpush1.bf16.msra.mxu0 0
        %1266 = vmatprep.subr.bf16.mxu0 0
        %1267 = vmatpush1.bf16.msra.mxu0 0
        %1268 = vmatprep.mubr.bf16.mxu0 0
        %1269 = vmatmul.mubr.bf16.gmra.mrb[0].mxu0 %v1234
        %v1270 = vpop.f32.mrb[0].mxu0
        %v1271 = vadd.f32 0.0, %v1270
        %v1272 = vpop.f32.mrb[0].mxu0
        %v1273 = vpop.f32.mrb[0].mxu0
        %v1274 = vpop.f32.mrb[0].mxu0
        %1275 = vdwg.mxu0
        %v1284 = vunpack.c.l.b16 %v1176
        %v1285 = vunpack.c.l.b16 %v1177
        %v1286 = vunpack.c.l.b16 %v1178
        %v1287 = vunpack.c.l.b16 %v1179
        %v1288 = vunpack.c.l.b16 %v1180
        %v1289 = vunpack.c.l.b16 %v1181
        %v1290 = vunpack.c.l.b16 %v1182
        %v1291 = vunpack.c.l.b16 %v1183
        %v1292 = vpack.c.b16 %v1285, %v1284
        %v1293 = vpack.c.b16 %v1287, %v1286
        %v1294 = vpack.c.b16 %v1289, %v1288
        %v1295 = vpack.c.b16 %v1291, %v1290
        %v1300 = vsel %vm984, %v1201, 0
        %1302 = vmatprep.subr.bf16.mxu0 0
        %1303 = vmatpush1.bf16.msra.mxu0 %v1292
        %1304 = vmatprep.subr.bf16.mxu0 0
        %1305 = vmatpush1.bf16.msra.mxu0 %v1293
        %1306 = vmatprep.subr.bf16.mxu0 0
        %1307 = vmatpush1.bf16.msra.mxu0 %v1294
        %1308 = vmatprep.subr.bf16.mxu0 0
        %1309 = vmatpush1.bf16.msra.mxu0 %v1295
        %1310 = vmatprep.subr.bf16.mxu0 0
        %1311 = vmatpush1.bf16.msra.mxu0 0
        %1312 = vmatprep.subr.bf16.mxu0 0
        %1313 = vmatpush1.bf16.msra.mxu0 0
        %1314 = vmatprep.subr.bf16.mxu0 0
        %1315 = vmatpush1.bf16.msra.mxu0 0
        %1316 = vmatprep.subr.bf16.mxu0 0
        %1317 = vmatpush1.bf16.msra.mxu0 0
        %1318 = vmatprep.subr.bf16.mxu0 0
        %1319 = vmatpush1.bf16.msra.mxu0 0
        %1320 = vmatprep.subr.bf16.mxu0 0
        %1321 = vmatpush1.bf16.msra.mxu0 0
        %1322 = vmatprep.subr.bf16.mxu0 0
        %1323 = vmatpush1.bf16.msra.mxu0 0
        %1324 = vmatprep.subr.bf16.mxu0 0
        %1325 = vmatpush1.bf16.msra.mxu0 0
        %1326 = vmatprep.subr.bf16.mxu0 0
        %1327 = vmatpush1.bf16.msra.mxu0 0
        %1328 = vmatprep.subr.bf16.mxu0 0
        %1329 = vmatpush1.bf16.msra.mxu0 0
        %1330 = vmatprep.subr.bf16.mxu0 0
        %1331 = vmatpush1.bf16.msra.mxu0 0
        %1332 = vmatprep.subr.bf16.mxu0 0
        %1333 = vmatpush1.bf16.msra.mxu0 0
        %1334 = vmatprep.mubr.bf16.mxu0 0
        %1335 = vmatmul.mubr.bf16.gmra.mrb[0].mxu0 %v1300
        %v1336 = vpop.f32.mrb[0].mxu0
        %v1337 = vadd.f32 %v1271, %v1336
        %v1338 = vpop.f32.mrb[0].mxu0
        %v1339 = vpop.f32.mrb[0].mxu0
        %v1340 = vpop.f32.mrb[0].mxu0
        %1341 = vdwg.mxu0
        %v1343 = vrot.slane %v1201, 1
        %v1352 = vunpack.c.l.b16 %v1192
        %v1353 = vunpack.c.l.b16 %v1193
        %v1354 = vunpack.c.l.b16 %v1194
        %v1355 = vunpack.c.l.b16 %v1195
        %v1356 = vunpack.c.l.b16 %v1196
        %v1357 = vunpack.c.l.b16 %v1197
        %v1358 = vunpack.c.l.b16 %v1198
        %v1359 = vunpack.c.l.b16 %v1199
        %v1360 = vpack.c.b16 %v1353, %v1352
        %v1361 = vpack.c.b16 %v1355, %v1354
        %v1362 = vpack.c.b16 %v1357, %v1356
        %v1363 = vpack.c.b16 %v1359, %v1358
        %v1369 = vsel %vm984, %v1343, 0
        %1371 = vmatprep.subr.bf16.mxu0 0
        %1372 = vmatpush1.bf16.msra.mxu0 %v1360
        %1373 = vmatprep.subr.bf16.mxu0 0
        %1374 = vmatpush1.bf16.msra.mxu0 %v1361
        %1375 = vmatprep.subr.bf16.mxu0 0
        %1376 = vmatpush1.bf16.msra.mxu0 %v1362
        %1377 = vmatprep.subr.bf16.mxu0 0
        %1378 = vmatpush1.bf16.msra.mxu0 %v1363
        %1379 = vmatprep.subr.bf16.mxu0 0
        %1380 = vmatpush1.bf16.msra.mxu0 0
        %1381 = vmatprep.subr.bf16.mxu0 0
        %1382 = vmatpush1.bf16.msra.mxu0 0
        %1383 = vmatprep.subr.bf16.mxu0 0
        %1384 = vmatpush1.bf16.msra.mxu0 0
        %1385 = vmatprep.subr.bf16.mxu0 0
        %1386 = vmatpush1.bf16.msra.mxu0 0
        %1387 = vmatprep.subr.bf16.mxu0 0
        %1388 = vmatpush1.bf16.msra.mxu0 0
        %1389 = vmatprep.subr.bf16.mxu0 0
        %1390 = vmatpush1.bf16.msra.mxu0 0
        %1391 = vmatprep.subr.bf16.mxu0 0
        %1392 = vmatpush1.bf16.msra.mxu0 0
        %1393 = vmatprep.subr.bf16.mxu0 0
        %1394 = vmatpush1.bf16.msra.mxu0 0
        %1395 = vmatprep.subr.bf16.mxu0 0
        %1396 = vmatpush1.bf16.msra.mxu0 0
        %1397 = vmatprep.subr.bf16.mxu0 0
        %1398 = vmatpush1.bf16.msra.mxu0 0
        %1399 = vmatprep.subr.bf16.mxu0 0
        %1400 = vmatpush1.bf16.msra.mxu0 0
        %1401 = vmatprep.subr.bf16.mxu0 0
        %1402 = vmatpush1.bf16.msra.mxu0 0
        %1403 = vmatprep.mubr.bf16.mxu0 0
        %1404 = vmatmul.mubr.bf16.gmra.mrb[0].mxu0 %v1369
        %v1405 = vpop.f32.mrb[0].mxu0
        %v1406 = vadd.f32 0.0, %v1405
        %v1407 = vpop.f32.mrb[0].mxu0
        %v1408 = vpop.f32.mrb[0].mxu0
        %v1409 = vpop.f32.mrb[0].mxu0
        %1410 = vdwg.mxu0
        %v1411 = vadd.f32 %v1337, %v1406
        %v1413 = vlaneseq
        %v1414 = vshrl.u32 %v1413, 7
        %v1415 = vsub.s32 0, %v1414
        %v1416 = vrot.slane %v1200, %v1415
        %v1418 = vadd.f32 %v1411, %v1416
        %vm1419 = vcmp.ge.f32.partialorder %v1418, 0.0
        %v1420 = vmul.f32 %v1418, 0.2
        %v1421 = vsel %vm1419, %v1418, %v1420
        %1422 = vst.msk [vmem:[#allocation4 + $0x1] sm:$0xf] %vm924, %v1421
        %v1423 = vld [vmem:[#allocation4] sm:$0x3f]
        %v1424 = vld [vmem:[%s13] sm:$0xf]
        %v1425 = vld [vmem:[%s13 + $0x4] sm:$0xf]
        %v1426 = vld [vmem:[%s13 + $0x8] sm:$0xf]
        %v1427 = vld [vmem:[%s13 + $0xc] sm:$0xf]
        %v1428 = vld [vmem:[%s13 + $0x10] sm:$0xf]
        %v1429 = vld [vmem:[%s13 + $0x14] sm:$0xf]
        %v1430 = vld [vmem:[%s13 + $0x18] sm:$0xf]
        %v1431 = vld [vmem:[%s13 + $0x1c] sm:$0xf]
        %v1432 = vld [vmem:[#allocation20] sm:$0xf]
        %v1433 = vld [vmem:[#allocation20 + $0x4] sm:$0xf]
        %v1434 = vld [vmem:[#allocation20 + $0x8] sm:$0xf]
        %v1435 = vld [vmem:[#allocation20 + $0xc] sm:$0xf]
        %v1436 = vld [vmem:[#allocation20 + $0x10] sm:$0xf]
        %v1437 = vld [vmem:[#allocation20 + $0x14] sm:$0xf]
        %v1438 = vld [vmem:[#allocation20 + $0x18] sm:$0xf]
        %v1439 = vld [vmem:[#allocation20 + $0x1c] sm:$0xf]
        %v1440 = vld [vmem:[#allocation21] sm:$0xf]
        %v1441 = vld [vmem:[#allocation21 + $0x4] sm:$0xf]
        %v1442 = vld [vmem:[#allocation21 + $0x8] sm:$0xf]
        %v1443 = vld [vmem:[#allocation21 + $0xc] sm:$0xf]
        %v1444 = vld [vmem:[#allocation21 + $0x10] sm:$0xf]
        %v1445 = vld [vmem:[#allocation21 + $0x14] sm:$0xf]
        %v1446 = vld [vmem:[#allocation21 + $0x18] sm:$0xf]
        %v1447 = vld [vmem:[#allocation21 + $0x1c] sm:$0xf]
        %v1448 = vld [vmem:[%s16] sm:$0x1]
        %v1449 = vpack.c.bf16 %v1423, %v1423
        %v1451 = vshrl.u32 %v1449, 16
        %v1453 = vshll.u32 %v1449, 16
        %v1455 = vrot.slane %v1453, 1
        %v1456 = vor.u32 %v1451, %v1455
        %v1465 = vunpack.c.l.b16 %v1432
        %v1466 = vunpack.c.l.b16 %v1433
        %v1467 = vunpack.c.l.b16 %v1434
        %v1468 = vunpack.c.l.b16 %v1435
        %v1469 = vunpack.c.l.b16 %v1436
        %v1470 = vunpack.c.l.b16 %v1437
        %v1471 = vunpack.c.l.b16 %v1438
        %v1472 = vunpack.c.l.b16 %v1439
        %v1473 = vpack.c.b16 %v1466, %v1465
        %v1474 = vpack.c.b16 %v1468, %v1467
        %v1475 = vpack.c.b16 %v1470, %v1469
        %v1476 = vpack.c.b16 %v1472, %v1471
        %v1482 = vsel %vm984, %v1456, 0
        %1484 = vmatprep.subr.bf16.mxu0 0
        %1485 = vmatpush1.bf16.msra.mxu0 %v1473
        %1486 = vmatprep.subr.bf16.mxu0 0
        %1487 = vmatpush1.bf16.msra.mxu0 %v1474
        %1488 = vmatprep.subr.bf16.mxu0 0
        %1489 = vmatpush1.bf16.msra.mxu0 %v1475
        %1490 = vmatprep.subr.bf16.mxu0 0
        %1491 = vmatpush1.bf16.msra.mxu0 %v1476
        %1492 = vmatprep.subr.bf16.mxu0 0
        %1493 = vmatpush1.bf16.msra.mxu0 0
        %1494 = vmatprep.subr.bf16.mxu0 0
        %1495 = vmatpush1.bf16.msra.mxu0 0
        %1496 = vmatprep.subr.bf16.mxu0 0
        %1497 = vmatpush1.bf16.msra.mxu0 0
        %1498 = vmatprep.subr.bf16.mxu0 0
        %1499 = vmatpush1.bf16.msra.mxu0 0
        %1500 = vmatprep.subr.bf16.mxu0 0
        %1501 = vmatpush1.bf16.msra.mxu0 0
        %1502 = vmatprep.subr.bf16.mxu0 0
        %1503 = vmatpush1.bf16.msra.mxu0 0
        %1504 = vmatprep.subr.bf16.mxu0 0
        %1505 = vmatpush1.bf16.msra.mxu0 0
        %1506 = vmatprep.subr.bf16.mxu0 0
        %1507 = vmatpush1.bf16.msra.mxu0 0
        %1508 = vmatprep.subr.bf16.mxu0 0
        %1509 = vmatpush1.bf16.msra.mxu0 0
        %1510 = vmatprep.subr.bf16.mxu0 0
        %1511 = vmatpush1.bf16.msra.mxu0 0
        %1512 = vmatprep.subr.bf16.mxu0 0
        %1513 = vmatpush1.bf16.msra.mxu0 0
        %1514 = vmatprep.subr.bf16.mxu0 0
        %1515 = vmatpush1.bf16.msra.mxu0 0
        %1516 = vmatprep.mubr.bf16.mxu0 0
        %1517 = vmatmul.mubr.bf16.gmra.mrb[0].mxu0 %v1482
        %v1518 = vpop.f32.mrb[0].mxu0
        %v1519 = vadd.f32 0.0, %v1518
        %v1520 = vpop.f32.mrb[0].mxu0
        %v1521 = vpop.f32.mrb[0].mxu0
        %v1522 = vpop.f32.mrb[0].mxu0
        %1523 = vdwg.mxu0
        %v1532 = vunpack.c.l.b16 %v1424
        %v1533 = vunpack.c.l.b16 %v1425
        %v1534 = vunpack.c.l.b16 %v1426
        %v1535 = vunpack.c.l.b16 %v1427
        %v1536 = vunpack.c.l.b16 %v1428
        %v1537 = vunpack.c.l.b16 %v1429
        %v1538 = vunpack.c.l.b16 %v1430
        %v1539 = vunpack.c.l.b16 %v1431
        %v1540 = vpack.c.b16 %v1533, %v1532
        %v1541 = vpack.c.b16 %v1535, %v1534
        %v1542 = vpack.c.b16 %v1537, %v1536
        %v1543 = vpack.c.b16 %v1539, %v1538
        %v1548 = vsel %vm984, %v1449, 0
        %1550 = vmatprep.subr.bf16.mxu0 0
        %1551 = vmatpush1.bf16.msra.mxu0 %v1540
        %1552 = vmatprep.subr.bf16.mxu0 0
        %1553 = vmatpush1.bf16.msra.mxu0 %v1541
        %1554 = vmatprep.subr.bf16.mxu0 0
        %1555 = vmatpush1.bf16.msra.mxu0 %v1542
        %1556 = vmatprep.subr.bf16.mxu0 0
        %1557 = vmatpush1.bf16.msra.mxu0 %v1543
        %1558 = vmatprep.subr.bf16.mxu0 0
        %1559 = vmatpush1.bf16.msra.mxu0 0
        %1560 = vmatprep.subr.bf16.mxu0 0
        %1561 = vmatpush1.bf16.msra.mxu0 0
        %1562 = vmatprep.subr.bf16.mxu0 0
        %1563 = vmatpush1.bf16.msra.mxu0 0
        %1564 = vmatprep.subr.bf16.mxu0 0
        %1565 = vmatpush1.bf16.msra.mxu0 0
        %1566 = vmatprep.subr.bf16.mxu0 0
        %1567 = vmatpush1.bf16.msra.mxu0 0
        %1568 = vmatprep.subr.bf16.mxu0 0
        %1569 = vmatpush1.bf16.msra.mxu0 0
        %1570 = vmatprep.subr.bf16.mxu0 0
        %1571 = vmatpush1.bf16.msra.mxu0 0
        %1572 = vmatprep.subr.bf16.mxu0 0
        %1573 = vmatpush1.bf16.msra.mxu0 0
        %1574 = vmatprep.subr.bf16.mxu0 0
        %1575 = vmatpush1.bf16.msra.mxu0 0
        %1576 = vmatprep.subr.bf16.mxu0 0
        %1577 = vmatpush1.bf16.msra.mxu0 0
        %1578 = vmatprep.subr.bf16.mxu0 0
        %1579 = vmatpush1.bf16.msra.mxu0 0
        %1580 = vmatprep.subr.bf16.mxu0 0
        %1581 = vmatpush1.bf16.msra.mxu0 0
        %1582 = vmatprep.mubr.bf16.mxu0 0
        %1583 = vmatmul.mubr.bf16.gmra.mrb[0].mxu0 %v1548
        %v1584 = vpop.f32.mrb[0].mxu0
        %v1585 = vadd.f32 %v1519, %v1584
        %v1586 = vpop.f32.mrb[0].mxu0
        %v1587 = vpop.f32.mrb[0].mxu0
        %v1588 = vpop.f32.mrb[0].mxu0
        %1589 = vdwg.mxu0
        %v1591 = vrot.slane %v1449, 1
        %v1600 = vunpack.c.l.b16 %v1440
        %v1601 = vunpack.c.l.b16 %v1441
        %v1602 = vunpack.c.l.b16 %v1442
        %v1603 = vunpack.c.l.b16 %v1443
        %v1604 = vunpack.c.l.b16 %v1444
        %v1605 = vunpack.c.l.b16 %v1445
        %v1606 = vunpack.c.l.b16 %v1446
        %v1607 = vunpack.c.l.b16 %v1447
        %v1608 = vpack.c.b16 %v1601, %v1600
        %v1609 = vpack.c.b16 %v1603, %v1602
        %v1610 = vpack.c.b16 %v1605, %v1604
        %v1611 = vpack.c.b16 %v1607, %v1606
        %v1617 = vsel %vm984, %v1591, 0
        %1619 = vmatprep.subr.bf16.mxu0 0
        %1620 = vmatpush1.bf16.msra.mxu0 %v1608
        %1621 = vmatprep.subr.bf16.mxu0 0
        %1622 = vmatpush1.bf16.msra.mxu0 %v1609
        %1623 = vmatprep.subr.bf16.mxu0 0
        %1624 = vmatpush1.bf16.msra.mxu0 %v1610
        %1625 = vmatprep.subr.bf16.mxu0 0
        %1626 = vmatpush1.bf16.msra.mxu0 %v1611
        %1627 = vmatprep.subr.bf16.mxu0 0
        %1628 = vmatpush1.bf16.msra.mxu0 0
        %1629 = vmatprep.subr.bf16.mxu0 0
        %1630 = vmatpush1.bf16.msra.mxu0 0
        %1631 = vmatprep.subr.bf16.mxu0 0
        %1632 = vmatpush1.bf16.msra.mxu0 0
        %1633 = vmatprep.subr.bf16.mxu0 0
        %1634 = vmatpush1.bf16.msra.mxu0 0
        %1635 = vmatprep.subr.bf16.mxu0 0
        %1636 = vmatpush1.bf16.msra.mxu0 0
        %1637 = vmatprep.subr.bf16.mxu0 0
        %1638 = vmatpush1.bf16.msra.mxu0 0
        %1639 = vmatprep.subr.bf16.mxu0 0
        %1640 = vmatpush1.bf16.msra.mxu0 0
        %1641 = vmatprep.subr.bf16.mxu0 0
        %1642 = vmatpush1.bf16.msra.mxu0 0
        %1643 = vmatprep.subr.bf16.mxu0 0
        %1644 = vmatpush1.bf16.msra.mxu0 0
        %1645 = vmatprep.subr.bf16.mxu0 0
        %1646 = vmatpush1.bf16.msra.mxu0 0
        %1647 = vmatprep.subr.bf16.mxu0 0
        %1648 = vmatpush1.bf16.msra.mxu0 0
        %1649 = vmatprep.subr.bf16.mxu0 0
        %1650 = vmatpush1.bf16.msra.mxu0 0
        %1651 = vmatprep.mubr.bf16.mxu0 0
        %1652 = vmatmul.mubr.bf16.gmra.mrb[0].mxu0 %v1617
        %v1653 = vpop.f32.mrb[0].mxu0
        %v1654 = vadd.f32 0.0, %v1653
        %v1655 = vpop.f32.mrb[0].mxu0
        %v1656 = vpop.f32.mrb[0].mxu0
        %v1657 = vpop.f32.mrb[0].mxu0
        %1658 = vdwg.mxu0
        %v1659 = vadd.f32 %v1585, %v1654
        %v1661 = vlaneseq
        %v1662 = vshrl.u32 %v1661, 7
        %v1663 = vsub.s32 0, %v1662
        %v1664 = vrot.slane %v1448, %v1663
        %v1666 = vadd.f32 %v1659, %v1664
        %vm1667 = vcmp.ge.f32.partialorder %v1666, 0.0
        %v1668 = vmul.f32 %v1666, 0.2
        %v1669 = vsel %vm1667, %v1666, %v1668
        %1670 = vst.msk [vmem:[#allocation5 + $0x1] sm:$0xf] %vm924, %v1669
        %v1671 = vld [vmem:[#allocation5] sm:$0x3f]
        %v1672 = vld [vmem:[%s17] sm:$0xf]
        %v1673 = vld [vmem:[%s17 + $0x4] sm:$0xf]
        %v1674 = vld [vmem:[%s17 + $0x8] sm:$0xf]
        %v1675 = vld [vmem:[%s17 + $0xc] sm:$0xf]
        %v1676 = vld [vmem:[%s17 + $0x10] sm:$0xf]
        %v1677 = vld [vmem:[%s17 + $0x14] sm:$0xf]
        %v1678 = vld [vmem:[%s17 + $0x18] sm:$0xf]
        %v1679 = vld [vmem:[%s17 + $0x1c] sm:$0xf]
        %v1680 = vpack.c.bf16 %v1671, %v1671
        %v1682 = vshrl.u32 %v1680, 16
        %v1684 = vshll.u32 %v1680, 16
        %v1686 = vrot.slane %v1684, 1
        %v1687 = vor.u32 %v1682, %v1686
        %v1696 = vunpack.c.l.b16 %v1672
        %v1697 = vunpack.c.l.b16 %v1673
        %v1698 = vunpack.c.l.b16 %v1674
        %v1699 = vunpack.c.l.b16 %v1675
        %v1700 = vunpack.c.l.b16 %v1676
        %v1701 = vunpack.c.l.b16 %v1677
        %v1702 = vunpack.c.l.b16 %v1678
        %v1703 = vunpack.c.l.b16 %v1679
        %v1704 = vpack.c.b16 %v1697, %v1696
        %v1705 = vpack.c.b16 %v1699, %v1698
        %v1706 = vpack.c.b16 %v1701, %v1700
        %v1707 = vpack.c.b16 %v1703, %v1702
        %1708 = vrot.lane.b32.xlu0 %v1704, 127
        %v1709 = vpop.permute.xlu0 %1708
        %1710 = vrot.lane.b32.xlu0 %v1705, 127
        %v1711 = vpop.permute.xlu0 %1710
        %1712 = vrot.lane.b32.xlu0 %v1706, 127
        %v1713 = vpop.permute.xlu0 %1712
        %1714 = vrot.lane.b32.xlu0 %v1707, 127
        %v1715 = vpop.permute.xlu0 %1714
        %v1721 = vsel %vm984, %v1687, 0
        %1723 = vmatprep.subr.bf16.mxu0 0
        %1724 = vmatpush1.bf16.msra.mxu0 %v1709
        %1725 = vmatprep.subr.bf16.mxu0 0
        %1726 = vmatpush1.bf16.msra.mxu0 %v1711
        %1727 = vmatprep.subr.bf16.mxu0 0
        %1728 = vmatpush1.bf16.msra.mxu0 %v1713
        %1729 = vmatprep.subr.bf16.mxu0 0
        %1730 = vmatpush1.bf16.msra.mxu0 %v1715
        %1731 = vmatprep.subr.bf16.mxu0 0
        %1732 = vmatpush1.bf16.msra.mxu0 0
        %1733 = vmatprep.subr.bf16.mxu0 0
        %1734 = vmatpush1.bf16.msra.mxu0 0
        %1735 = vmatprep.subr.bf16.mxu0 0
        %1736 = vmatpush1.bf16.msra.mxu0 0
        %1737 = vmatprep.subr.bf16.mxu0 0
        %1738 = vmatpush1.bf16.msra.mxu0 0
        %1739 = vmatprep.subr.bf16.mxu0 0
        %1740 = vmatpush1.bf16.msra.mxu0 0
        %1741 = vmatprep.subr.bf16.mxu0 0
        %1742 = vmatpush1.bf16.msra.mxu0 0
        %1743 = vmatprep.subr.bf16.mxu0 0
        %1744 = vmatpush1.bf16.msra.mxu0 0
        %1745 = vmatprep.subr.bf16.mxu0 0
        %1746 = vmatpush1.bf16.msra.mxu0 0
        %1747 = vmatprep.subr.bf16.mxu0 0
        %1748 = vmatpush1.bf16.msra.mxu0 0
        %1749 = vmatprep.subr.bf16.mxu0 0
        %1750 = vmatpush1.bf16.msra.mxu0 0
        %1751 = vmatprep.subr.bf16.mxu0 0
        %1752 = vmatpush1.bf16.msra.mxu0 0
        %1753 = vmatprep.subr.bf16.mxu0 0
        %1754 = vmatpush1.bf16.msra.mxu0 0
        %1755 = vmatprep.mubr.bf16.mxu0 0
        %1756 = vmatmul.mubr.bf16.gmra.mrb[0].mxu0 %v1721
        %v1757 = vpop.f32.mrb[0].mxu0
        %v1758 = vadd.f32 0.0, %v1757
        %v1759 = vpop.f32.mrb[0].mxu0
        %v1760 = vpop.f32.mrb[0].mxu0
        %v1761 = vpop.f32.mrb[0].mxu0
        %1762 = vdwg.mxu0
        %v1767 = vsel %vm984, %v1680, 0
        %1769 = vmatprep.subr.bf16.mxu0 0
        %1770 = vmatpush1.bf16.msra.mxu0 %v1704
        %1771 = vmatprep.subr.bf16.mxu0 0
        %1772 = vmatpush1.bf16.msra.mxu0 %v1705
        %1773 = vmatprep.subr.bf16.mxu0 0
        %1774 = vmatpush1.bf16.msra.mxu0 %v1706
        %1775 = vmatprep.subr.bf16.mxu0 0
        %1776 = vmatpush1.bf16.msra.mxu0 %v1707
        %1777 = vmatprep.subr.bf16.mxu0 0
        %1778 = vmatpush1.bf16.msra.mxu0 0
        %1779 = vmatprep.subr.bf16.mxu0 0
        %1780 = vmatpush1.bf16.msra.mxu0 0
        %1781 = vmatprep.subr.bf16.mxu0 0
        %1782 = vmatpush1.bf16.msra.mxu0 0
        %1783 = vmatprep.subr.bf16.mxu0 0
        %1784 = vmatpush1.bf16.msra.mxu0 0
        %1785 = vmatprep.subr.bf16.mxu0 0
        %1786 = vmatpush1.bf16.msra.mxu0 0
        %1787 = vmatprep.subr.bf16.mxu0 0
        %1788 = vmatpush1.bf16.msra.mxu0 0
        %1789 = vmatprep.subr.bf16.mxu0 0
        %1790 = vmatpush1.bf16.msra.mxu0 0
        %1791 = vmatprep.subr.bf16.mxu0 0
        %1792 = vmatpush1.bf16.msra.mxu0 0
        %1793 = vmatprep.subr.bf16.mxu0 0
        %1794 = vmatpush1.bf16.msra.mxu0 0
        %1795 = vmatprep.subr.bf16.mxu0 0
        %1796 = vmatpush1.bf16.msra.mxu0 0
        %1797 = vmatprep.subr.bf16.mxu0 0
        %1798 = vmatpush1.bf16.msra.mxu0 0
        %1799 = vmatprep.subr.bf16.mxu0 0
        %1800 = vmatpush1.bf16.msra.mxu0 0
        %1801 = vmatprep.mubr.bf16.mxu0 0
        %1802 = vmatmul.mubr.bf16.gmra.mrb[0].mxu0 %v1767
        %v1803 = vpop.f32.mrb[0].mxu0
        %v1804 = vadd.f32 %v1758, %v1803
        %v1805 = vpop.f32.mrb[0].mxu0
        %v1806 = vpop.f32.mrb[0].mxu0
        %v1807 = vpop.f32.mrb[0].mxu0
        %1808 = vdwg.mxu0
        %v1810 = vrot.slane %v1680, 1
        %1811 = vrot.lane.b32.xlu0 %v1704, 126
        %v1812 = vpop.permute.xlu0 %1811
        %1813 = vrot.lane.b32.xlu0 %v1705, 126
        %v1814 = vpop.permute.xlu0 %1813
        %1815 = vrot.lane.b32.xlu0 %v1706, 126
        %v1816 = vpop.permute.xlu0 %1815
        %1817 = vrot.lane.b32.xlu0 %v1707, 126
        %v1818 = vpop.permute.xlu0 %1817
        %v1824 = vsel %vm984, %v1810, 0
        %1826 = vmatprep.subr.bf16.mxu0 0
        %1827 = vmatpush1.bf16.msra.mxu0 %v1812
        %1828 = vmatprep.subr.bf16.mxu0 0
        %1829 = vmatpush1.bf16.msra.mxu0 %v1814
        %1830 = vmatprep.subr.bf16.mxu0 0
        %1831 = vmatpush1.bf16.msra.mxu0 %v1816
        %1832 = vmatprep.subr.bf16.mxu0 0
        %1833 = vmatpush1.bf16.msra.mxu0 %v1818
        %1834 = vmatprep.subr.bf16.mxu0 0
        %1835 = vmatpush1.bf16.msra.mxu0 0
        %1836 = vmatprep.subr.bf16.mxu0 0
        %1837 = vmatpush1.bf16.msra.mxu0 0
        %1838 = vmatprep.subr.bf16.mxu0 0
        %1839 = vmatpush1.bf16.msra.mxu0 0
        %1840 = vmatprep.subr.bf16.mxu0 0
        %1841 = vmatpush1.bf16.msra.mxu0 0
        %1842 = vmatprep.subr.bf16.mxu0 0
        %1843 = vmatpush1.bf16.msra.mxu0 0
        %1844 = vmatprep.subr.bf16.mxu0 0
        %1845 = vmatpush1.bf16.msra.mxu0 0
        %1846 = vmatprep.subr.bf16.mxu0 0
        %1847 = vmatpush1.bf16.msra.mxu0 0
        %1848 = vmatprep.subr.bf16.mxu0 0
        %1849 = vmatpush1.bf16.msra.mxu0 0
        %1850 = vmatprep.subr.bf16.mxu0 0
        %1851 = vmatpush1.bf16.msra.mxu0 0
        %1852 = vmatprep.subr.bf16.mxu0 0
        %1853 = vmatpush1.bf16.msra.mxu0 0
        %1854 = vmatprep.subr.bf16.mxu0 0
        %1855 = vmatpush1.bf16.msra.mxu0 0
        %1856 = vmatprep.subr.bf16.mxu0 0
        %1857 = vmatpush1.bf16.msra.mxu0 0
        %1858 = vmatprep.mubr.bf16.mxu0 0
        %1859 = vmatmul.mubr.bf16.gmra.mrb[0].mxu0 %v1824
        %v1860 = vpop.f32.mrb[0].mxu0
        %v1861 = vadd.f32 0.0, %v1860
        %v1862 = vpop.f32.mrb[0].mxu0
        %v1863 = vpop.f32.mrb[0].mxu0
        %v1864 = vpop.f32.mrb[0].mxu0
        %1865 = vdwg.mxu0
        %v1866 = vadd.f32 %v1804, %v1861
        %v1867 = vrot.slane %v1682, 1
        %v1868 = vrot.slane %v1684, 2
        %v1869 = vor.u32 %v1867, %v1868
        %1870 = vrot.lane.b32.xlu0 %v1704, 125
        %v1871 = vpop.permute.xlu0 %1870
        %1872 = vrot.lane.b32.xlu0 %v1705, 125
        %v1873 = vpop.permute.xlu0 %1872
        %1874 = vrot.lane.b32.xlu0 %v1706, 125
        %v1875 = vpop.permute.xlu0 %1874
        %1876 = vrot.lane.b32.xlu0 %v1707, 125
        %v1877 = vpop.permute.xlu0 %1876
        %v1883 = vsel %vm984, %v1869, 0
        %1885 = vmatprep.subr.bf16.mxu0 0
        %1886 = vmatpush1.bf16.msra.mxu0 %v1871
        %1887 = vmatprep.subr.bf16.mxu0 0
        %1888 = vmatpush1.bf16.msra.mxu0 %v1873
        %1889 = vmatprep.subr.bf16.mxu0 0
        %1890 = vmatpush1.bf16.msra.mxu0 %v1875
        %1891 = vmatprep.subr.bf16.mxu0 0
        %1892 = vmatpush1.bf16.msra.mxu0 %v1877
        %1893 = vmatprep.subr.bf16.mxu0 0
        %1894 = vmatpush1.bf16.msra.mxu0 0
        %1895 = vmatprep.subr.bf16.mxu0 0
        %1896 = vmatpush1.bf16.msra.mxu0 0
        %1897 = vmatprep.subr.bf16.mxu0 0
        %1898 = vmatpush1.bf16.msra.mxu0 0
        %1899 = vmatprep.subr.bf16.mxu0 0
        %1900 = vmatpush1.bf16.msra.mxu0 0
        %1901 = vmatprep.subr.bf16.mxu0 0
        %1902 = vmatpush1.bf16.msra.mxu0 0
        %1903 = vmatprep.subr.bf16.mxu0 0
        %1904 = vmatpush1.bf16.msra.mxu0 0
        %1905 = vmatprep.subr.bf16.mxu0 0
        %1906 = vmatpush1.bf16.msra.mxu0 0
        %1907 = vmatprep.subr.bf16.mxu0 0
        %1908 = vmatpush1.bf16.msra.mxu0 0
        %1909 = vmatprep.subr.bf16.mxu0 0
        %1910 = vmatpush1.bf16.msra.mxu0 0
        %1911 = vmatprep.subr.bf16.mxu0 0
        %1912 = vmatpush1.bf16.msra.mxu0 0
        %1913 = vmatprep.subr.bf16.mxu0 0
        %1914 = vmatpush1.bf16.msra.mxu0 0
        %1915 = vmatprep.subr.bf16.mxu0 0
        %1916 = vmatpush1.bf16.msra.mxu0 0
        %1917 = vmatprep.mubr.bf16.mxu0 0
        %1918 = vmatmul.mubr.bf16.gmra.mrb[0].mxu0 %v1883
        %v1919 = vpop.f32.mrb[0].mxu0
        %v1920 = vadd.f32 0.0, %v1919
        %v1921 = vpop.f32.mrb[0].mxu0
        %v1922 = vpop.f32.mrb[0].mxu0
        %v1923 = vpop.f32.mrb[0].mxu0
        %1924 = vdwg.mxu0
        %v1925 = vadd.f32 %v1866, %v1920
        %v1926 = vld [vmem:[#allocation6] sm:$0x1]
        %v1928 = vlaneseq
        %v1929 = vshrl.u32 %v1928, 7
        %v1930 = vsub.s32 0, %v1929
        %v1931 = vrot.slane %v1926, %v1930
        %v1933 = vadd.f32 %v1925, %v1931
        %vm1934 = vcmask 2048
        %1935 = vst.msk [vmem:[%s741] sm:$0x7] %vm1934, %v1933
        %p1936 = scmp.lt.s32.totalorder %s38, 1
        %s1937 = scalar_select %p1936, %s38, 1
        %s1938 = smul.addr %s1937, 4
        %s1939 = scalar_lea.vmem %s19, %s1938
        // Predicated region
        $region137: #{discriminator_forward.1} parent=95 // pred_check
          %p1940 = pneg %p460
        $region138: #{discriminator_forward.1} parent=95 // pred_check_branch
          %1942 = sbr.rel (%p1940) target = $region140
        $region139: #{discriminator_forward.1} parent=95 // pred_region
          _
        $region140: #{discriminator_forward.1} parent=95 // pred_fallthru
          _
      $region96: #{discriminator_forward.1} parent=5 // pred_fallthru
        _
      %p1943 = scmp.le.s32.totalorder 2, %s33
      // Predicated region
      $region141: #{discriminator_forward.1} parent=5 // pred_check
        %p1944 = pneg %p1943
      $region142: #{discriminator_forward.1} parent=5 // pred_check_branch
        %1946 = sbr.rel (%p1944) target = $region144
      $region143: #{discriminator_forward.1} parent=5 // pred_region
        %s1947 = ssub.s32 %s33, 2
        // Predicated region
        $region145: #{discriminator_forward.1} parent=143 // pred_check
          %p1948 = pneg %p466
        $region146: #{discriminator_forward.1} parent=143 // pred_check_branch
          %1950 = sbr.rel (%p1948) target = $region148
        $region147: #{discriminator_forward.1} parent=143 // pred_region
          %p1951 = scmp.lt.s32.totalorder %s39, 1
          %s1952 = scalar_select %p1951, %s39, 1
          %s1953 = smul.addr %s1952, 4
          %s1954 = scalar_lea.vmem %s19, %s1953
        $region148: #{discriminator_forward.1} parent=143 // pred_fallthru
          _
      $region144: #{discriminator_forward.1} parent=5 // pred_fallthru
        _
    $region6: #{discriminator_forward.1} parent=1 // loop_footer
      %s37 = sadd.s32 1, %s33
    $region7: #{discriminator_forward.1} parent=1 // loop_footer_branch
      %32 = sbr.rel target = $region3
    $region8: #{discriminator_forward.1} parent=1 // loop_exit
      _
    %1955 = vsyncpa [#allocation8], 1
    %s1956 = scalar_lea.sflag [#allocation8], 1
    %1957 = vsyncpa %s1956, 1
    %1958 = vsyncpa [#allocation10], 1
    %1959 = vsyncpa [#allocation13], 1
    %1960 = vsyncpa [#allocation16], 1
    %1961 = vsyncpa [#allocation19], 1
    %1962 = vsyncpa [#allocation22], 1

</llo_original>
